<compile_context>
chip_gen: v7x
topology: tpu7x:2x2x1
jax: 0.10.0
libtpu: 0.0.40
codegen_flags: <defaults>
</compile_context>

<pallas_src>
import math
from functools import partial

import jax
import jax.numpy as jnp
import numpy as np
from jax.experimental import pallas as pl
from jax.experimental.pallas import tpu as pltpu

# ---------------- model hyper-parameters (small, consistent with module) -----
B = 2          # batch
D = 32         # d_model
H = 4          # nhead
FF = 64        # dim_feedforward
LQ = 8         # query tokens
L1 = 16        # image tokens (x1)
L2 = 12        # text tokens  (x2) -- unused in default-config forward path
EPS = 1e-5


# ---------------- Pallas kernel: fused encoder layer (query rows only) -------
def _fused_layer_kernel(x1_ref, q_ref, wmat_ref, w2_ref, vec_ref,
                        out_ref, attn_s, *, num_heads):
    b_, l1_, d_ = x1_ref.shape
    _, lq_, _ = q_ref.shape
    hd = d_ // num_heads
    ff = wmat_ref.shape[1] - 4 * d_
    scale = 1.0 / math.sqrt(hd)

    # flattened token slabs (tile-aligned leading-dim collapse, no data motion)
    x1f = x1_ref[...].reshape(b_ * l1_, d_).astype(jnp.float32)    # (B*L1, D)
    qf = q_ref[...].reshape(b_ * lq_, d_).astype(jnp.float32)      # (B*LQ, D)

    wmat = wmat_ref[...].astype(jnp.float32)            # [wqkv | wo | w1]
    w_qkv = wmat[:, :3 * d_]
    w_kv = wmat[:, d_:3 * d_]
    w_o = wmat[:, 3 * d_:4 * d_]
    w_1 = wmat[:, 4 * d_:4 * d_ + ff]

    vec = vec_ref[...].astype(jnp.float32)               # packed biases / LN
    b_qkv = vec[0:1, :3 * d_]
    b_kv = vec[0:1, d_:3 * d_]
    b_o = vec[1:2, :d_]
    ln1_g = vec[1:2, d_:2 * d_]
    ln1_b = vec[1:2, 2 * d_:3 * d_]
    b_1 = vec[2:3, :ff]
    b_2 = vec[2:3, ff:ff + d_]
    ln2_g = vec[3:4, :d_]
    ln2_b = vec[3:4, d_:2 * d_]

    # projections: full QKV only for the query rows, K/V only for x1 rows
    qkv_q = jnp.dot(qf, w_qkv, preferred_element_type=jnp.float32) + b_qkv   # (B*LQ, 3D)
    kv_x1 = jnp.dot(x1f, w_kv, preferred_element_type=jnp.float32) + b_kv    # (B*L1, 2D)

    dn = (((1,), (1,)), ((), ()))   # q @ k^T without explicit transpose
    for b in range(b_):                                   # static, B small
        q_b = qkv_q[b * lq_:(b + 1) * lq_, :d_]                              # (LQ, D)
        k_b = jnp.concatenate(
            [kv_x1[b * l1_:(b + 1) * l1_, :d_],
             qkv_q[b * lq_:(b + 1) * lq_, d_:2 * d_]], axis=0)               # (S, D)
        v_b = jnp.concatenate(
            [kv_x1[b * l1_:(b + 1) * l1_, d_:2 * d_],
             qkv_q[b * lq_:(b + 1) * lq_, 2 * d_:3 * d_]], axis=0)           # (S, D)
        for h in range(num_heads):                        # static, H small
            lo, hi = h * hd, (h + 1) * hd
            s = jax.lax.dot_general(q_b[:, lo:hi], k_b[:, lo:hi], dn,
                                    preferred_element_type=jnp.float32) * scale
            s = s - jnp.max(s, axis=-1, keepdims=True)
            p = jnp.exp(s)
            p = p * pl.reciprocal(jnp.sum(p, axis=-1, keepdims=True),
                                  approx=True)            # EUP, off the VPU path
            attn_s[b * lq_:(b + 1) * lq_, lo:hi] = jnp.dot(
                p, v_b[:, lo:hi], preferred_element_type=jnp.float32)

    attn = jnp.dot(attn_s[...], w_o, preferred_element_type=jnp.float32) + b_o

    # residual + LayerNorm1 (post-norm), query rows only
    y = qf + attn
    mu = jnp.mean(y, axis=-1, keepdims=True)
    var = jnp.mean((y - mu) ** 2, axis=-1, keepdims=True)
    y = (y - mu) * jax.lax.rsqrt(var + EPS) * ln1_g + ln1_b

    # feed-forward (linear -> ReLU -> linear)
    h1 = jnp.maximum(jnp.dot(y, w_1, preferred_element_type=jnp.float32) + b_1, 0.0)
    f = jnp.dot(h1, w2_ref[...].astype(jnp.float32),
                preferred_element_type=jnp.float32) + b_2

    # residual + LayerNorm2
    z = y + f
    mu2 = jnp.mean(z, axis=-1, keepdims=True)
    var2 = jnp.mean((z - mu2) ** 2, axis=-1, keepdims=True)
    z = (z - mu2) * jax.lax.rsqrt(var2 + EPS) * ln2_g + ln2_b

    out_ref[...] = z.astype(out_ref.dtype)                # (B*LQ, D)


def encoder_layer_pallas(x1, q, packed):
    """Fused encoder layer; returns only the last LQ tokens, flattened (B*LQ, D)."""
    bsz, l1, d = x1.shape
    _, lq, _ = q.shape
    wmat, w2, vec = packed["wmat"], packed["w2"], packed["vec"]

    kernel = partial(_fused_layer_kernel, num_heads=H)
    return pl.pallas_call(
        kernel,
        out_shape=jax.ShapeDtypeStruct((bsz * lq, d), q.dtype),
        grid=(1,),                                        # single invocation
        in_specs=[
            pl.BlockSpec(x1.shape, lambda i: (0, 0, 0)),
            pl.BlockSpec(q.shape, lambda i: (0, 0, 0)),
            pl.BlockSpec(wmat.shape, lambda i: (0, 0)),
            pl.BlockSpec(w2.shape, lambda i: (0, 0)),
            pl.BlockSpec(vec.shape, lambda i: (0, 0)),
        ],
        out_specs=pl.BlockSpec((bsz * lq, d), lambda i: (0, 0)),
        scratch_shapes=[pltpu.VMEM((bsz * lq, d), jnp.float32)],
        compiler_params=pltpu.CompilerParams(
            dimension_semantics=("arbitrary",)),
    )(x1, q, wmat, w2, vec)


# ---------------- module forward (concat & slice fused into the kernel) ------
def interleaved_transformer_forward(q, x1, x2, packed):
    # Default config path:
    #   i = 0, interleaved_with_text -> x_ = x1
    #   ca_with_text=False -> out = encoder(cat([x1, q], seq)); return out[:, -Lq:]
    # x2 is part of the input tuple but unused with num_trans=1 / no film.
    del x2
    bsz, lq, d = q.shape
    out_flat = encoder_layer_pallas(x1, q, packed)        # (B*LQ, D)
    return out_flat.reshape(bsz, lq, d)                   # free metadata reshape


# ---------------- pure-JAX reference (for correctness check) -----------------
def _encoder_layer_ref(x, p):
    bsz, S, d = x.shape
    hd = d // H
    qkv = x @ p["wqkv"] + p["bqkv"][0]
    q, k, v = qkv[..., :d], qkv[..., d:2 * d], qkv[..., 2 * d:]

    def split(t):
        return t.reshape(bsz, S, H, hd).transpose(0, 2, 1, 3)  # (B,H,S,hd)

    qh, kh, vh = split(q), split(k), split(v)
    s = jnp.einsum("bhqd,bhkd->bhqk", qh, kh) / math.sqrt(hd)
    p_attn = jax.nn.softmax(s, axis=-1)
    a = jnp.einsum("bhqk,bhkd->bhqd", p_attn, vh)
    a = a.transpose(0, 2, 1, 3).reshape(bsz, S, d)
    a = a @ p["wo"] + p["bo"][0]

    y = x + a
    mu = y.mean(-1, keepdims=True)
    var = ((y - mu) ** 2).mean(-1, keepdims=True)
    y = (y - mu) * jax.lax.rsqrt(var + EPS) * p["ln1_g"][0] + p["ln1_b"][0]

    f = jnp.maximum(y @ p["w1"] + p["b1"][0], 0.0) @ p["w2"] + p["b2"][0]
    z = y + f
    mu2 = z.mean(-1, keepdims=True)
    var2 = ((z - mu2) ** 2).mean(-1, keepdims=True)
    return (z - mu2) * jax.lax.rsqrt(var2 + EPS) * p["ln2_g"][0] + p["ln2_b"][0]


def _forward_ref(q, x1, x2, params):
    del x2
    xcat = jnp.concatenate([x1, q], axis=1)
    return _encoder_layer_ref(xcat, params)[:, -q.shape[1]:, :]


# ---------------- deterministic parameter init --------------------------------
def make_params(key):
    ks = jax.random.split(key, 8)
    scale = 0.05
    return {
        # stored transposed so kernel uses right-multiplication: y = x @ W + b
        "wqkv": scale * jax.random.normal(ks[0], (D, 3 * D), jnp.float32),
        "bqkv": scale * jax.random.normal(ks[1], (1, 3 * D), jnp.float32),
        "wo":   scale * jax.random.normal(ks[2], (D, D), jnp.float32),
        "bo":   scale * jax.random.normal(ks[3], (1, D), jnp.float32),
        "ln1_g": jnp.ones((1, D), jnp.float32),
        "ln1_b": jnp.zeros((1, D), jnp.float32),
        "ln2_g": jnp.ones((1, D), jnp.float32),
        "ln2_b": jnp.zeros((1, D), jnp.float32),
        "w1":   scale * jax.random.normal(ks[4], (D, FF), jnp.float32),
        "b1":   scale * jax.random.normal(ks[5], (1, FF), jnp.float32),
        "w2":   scale * jax.random.normal(ks[6], (FF, D), jnp.float32),
        "b2":   scale * jax.random.normal(ks[7], (1, D), jnp.float32),
    }


def pack_params(p):
    """Pack 12 tensors into 3 kernel inputs (done once, outside the hot path)."""
    wmat = jnp.concatenate([p["wqkv"], p["wo"], p["w1"]], axis=1)   # (D, 3D+D+FF)
    vw = max(3 * D, FF + D, 2 * D)                                   # = 96 here
    vec = jnp.zeros((4, vw), jnp.float32)
    vec = vec.at[0, :3 * D].set(p["bqkv"][0])
    vec = vec.at[1, :D].set(p["bo"][0])
    vec = vec.at[1, D:2 * D].set(p["ln1_g"][0])
    vec = vec.at[1, 2 * D:3 * D].set(p["ln1_b"][0])
    vec = vec.at[2, :FF].set(p["b1"][0])
    vec = vec.at[2, FF:FF + D].set(p["b2"][0])
    vec = vec.at[3, :D].set(p["ln2_g"][0])
    vec = vec.at[3, D:2 * D].set(p["ln2_b"][0])
    return {"wmat": wmat, "w2": p["w2"], "vec": vec}


if __name__ == "__main__":
    key = jax.random.PRNGKey(0)
    kq, k1, k2, kp = jax.random.split(key, 4)
    q = jax.random.normal(kq, (B, LQ, D), jnp.float32)
    x1 = jax.random.normal(k1, (B, L1, D), jnp.float32)
    x2 = jax.random.normal(k2, (B, L2, D), jnp.float32)
    params = make_params(kp)
    packed = pack_params(params)

    out = interleaved_transformer_forward(q, x1, x2, packed)
    out = jax.block_until_ready(out)

    ref = _forward_ref(q, x1, x2, params)
    assert out.shape == (B, LQ, D)
    # tolerance slightly relaxed vs 1e-4: softmax uses approx EUP reciprocal
    np.testing.assert_allclose(np.asarray(out), np.asarray(ref),
                               rtol=1e-3, atol=1e-3)
    print("KERNEL_OK")
</pallas_src>

<mosaic_0001>
module attributes {stable_mosaic.version = 11 : i64} {
  func.func @_fused_layer_kernel(%arg0: i32, %arg1: memref<2x16x32xf32, #tpu.memory_space<vmem>>, %arg2: memref<2x8x32xf32, #tpu.memory_space<vmem>>, %arg3: memref<32x192xf32, #tpu.memory_space<vmem>>, %arg4: memref<64x32xf32, #tpu.memory_space<vmem>>, %arg5: memref<4x96xf32, #tpu.memory_space<vmem>>, %arg6: memref<16x32xf32, #tpu.memory_space<vmem>>, %arg7: memref<16x32xf32, #tpu.memory_space<vmem>>) attributes {dimension_semantics = [#tpu.dimension_semantics<arbitrary>], iteration_bounds = array<i64: 1>, scalar_prefetch = 0 : i64, scratch_operands = 1 : i64, tpu.core_type = #tpu.core_type<tc>, window_params = [{pipeline_mode = #tpu.pipeline_mode<synchronous>, transform_indices = @transform_0, window_bounds = array<i64: 2, 16, 32>}, {pipeline_mode = #tpu.pipeline_mode<synchronous>, transform_indices = @transform_1, window_bounds = array<i64: 2, 8, 32>}, {pipeline_mode = #tpu.pipeline_mode<synchronous>, transform_indices = @transform_2, window_bounds = array<i64: 32, 192>}, {pipeline_mode = #tpu.pipeline_mode<synchronous>, transform_indices = @transform_3, window_bounds = array<i64: 64, 32>}, {pipeline_mode = #tpu.pipeline_mode<synchronous>, transform_indices = @transform_4, window_bounds = array<i64: 4, 96>}, {pipeline_mode = #tpu.pipeline_mode<synchronous>, transform_indices = @transform_5, window_bounds = array<i64: 16, 32>}]} {
    %c0 = arith.constant 0 : index
    %c0_0 = arith.constant 0 : index
    %c0_1 = arith.constant 0 : index
    %0 = vector.load %arg1[%c0, %c0_0, %c0_1] : memref<2x16x32xf32, #tpu.memory_space<vmem>>, vector<2x16x32xf32>
    %1 = vector.shape_cast %0 : vector<2x16x32xf32> to vector<32x32xf32>
    %c0_2 = arith.constant 0 : index
    %c0_3 = arith.constant 0 : index
    %c0_4 = arith.constant 0 : index
    %2 = vector.load %arg2[%c0_2, %c0_3, %c0_4] : memref<2x8x32xf32, #tpu.memory_space<vmem>>, vector<2x8x32xf32>
    %3 = vector.shape_cast %2 : vector<2x8x32xf32> to vector<16x32xf32>
    %c0_5 = arith.constant 0 : index
    %c0_6 = arith.constant 0 : index
    %4 = vector.load %arg3[%c0_5, %c0_6] : memref<32x192xf32, #tpu.memory_space<vmem>>, vector<32x192xf32>
    %5 = vector.extract_strided_slice %4 {offsets = [0, 0], sizes = [32, 96], strides = [1, 1]} : vector<32x192xf32> to vector<32x96xf32>
    %6 = vector.extract_strided_slice %4 {offsets = [0, 32], sizes = [32, 64], strides = [1, 1]} : vector<32x192xf32> to vector<32x64xf32>
    %7 = vector.extract_strided_slice %4 {offsets = [0, 96], sizes = [32, 32], strides = [1, 1]} : vector<32x192xf32> to vector<32x32xf32>
    %8 = vector.extract_strided_slice %4 {offsets = [0, 128], sizes = [32, 64], strides = [1, 1]} : vector<32x192xf32> to vector<32x64xf32>
    %c0_7 = arith.constant 0 : index
    %c0_8 = arith.constant 0 : index
    %9 = vector.load %arg5[%c0_7, %c0_8] : memref<4x96xf32, #tpu.memory_space<vmem>>, vector<4x96xf32>
    %10 = vector.extract_strided_slice %9 {offsets = [0, 0], sizes = [1, 96], strides = [1, 1]} : vector<4x96xf32> to vector<1x96xf32>
    %11 = vector.extract_strided_slice %9 {offsets = [0, 32], sizes = [1, 64], strides = [1, 1]} : vector<4x96xf32> to vector<1x64xf32>
    %12 = vector.extract_strided_slice %9 {offsets = [1, 0], sizes = [1, 32], strides = [1, 1]} : vector<4x96xf32> to vector<1x32xf32>
    %13 = vector.extract_strided_slice %9 {offsets = [1, 32], sizes = [1, 32], strides = [1, 1]} : vector<4x96xf32> to vector<1x32xf32>
    %14 = vector.extract_strided_slice %9 {offsets = [1, 64], sizes = [1, 32], strides = [1, 1]} : vector<4x96xf32> to vector<1x32xf32>
    %15 = vector.extract_strided_slice %9 {offsets = [2, 0], sizes = [1, 64], strides = [1, 1]} : vector<4x96xf32> to vector<1x64xf32>
    %16 = vector.extract_strided_slice %9 {offsets = [2, 64], sizes = [1, 32], strides = [1, 1]} : vector<4x96xf32> to vector<1x32xf32>
    %17 = vector.extract_strided_slice %9 {offsets = [3, 0], sizes = [1, 32], strides = [1, 1]} : vector<4x96xf32> to vector<1x32xf32>
    %18 = vector.extract_strided_slice %9 {offsets = [3, 32], sizes = [1, 32], strides = [1, 1]} : vector<4x96xf32> to vector<1x32xf32>
    %cst = arith.constant dense<0.000000e+00> : vector<16x96xf32>
    %19 = tpu.matmul %3, %5, %cst {dimension_numbers = #tpu.dot_dimension_numbers<[1], [0], [0], [1], [0, 0, 1, 1], [], []>} : vector<16x32xf32>, vector<32x96xf32>, vector<16x96xf32> -> vector<16x96xf32>
    %20 = vector.broadcast %10 : vector<1x96xf32> to vector<16x96xf32>
    %21 = arith.addf %19, %20 : vector<16x96xf32>
    %cst_9 = arith.constant dense<0.000000e+00> : vector<32x64xf32>
    %22 = tpu.matmul %1, %6, %cst_9 {dimension_numbers = #tpu.dot_dimension_numbers<[1], [0], [0], [1], [0, 0, 1, 1], [], []>} : vector<32x32xf32>, vector<32x64xf32>, vector<32x64xf32> -> vector<32x64xf32>
    %23 = vector.broadcast %11 : vector<1x64xf32> to vector<32x64xf32>
    %24 = arith.addf %22, %23 : vector<32x64xf32>
    %25 = vector.extract_strided_slice %21 {offsets = [0, 0], sizes = [8, 32], strides = [1, 1]} : vector<16x96xf32> to vector<8x32xf32>
    %26 = vector.extract_strided_slice %24 {offsets = [0, 0], sizes = [16, 32], strides = [1, 1]} : vector<32x64xf32> to vector<16x32xf32>
    %27 = vector.extract_strided_slice %21 {offsets = [0, 32], sizes = [8, 32], strides = [1, 1]} : vector<16x96xf32> to vector<8x32xf32>
    %28 = tpu.concatenate %26, %27 in 0 : vector<16x32xf32>, vector<8x32xf32> -> vector<24x32xf32>
    %29 = vector.extract_strided_slice %24 {offsets = [0, 32], sizes = [16, 32], strides = [1, 1]} : vector<32x64xf32> to vector<16x32xf32>
    %30 = vector.extract_strided_slice %21 {offsets = [0, 64], sizes = [8, 32], strides = [1, 1]} : vector<16x96xf32> to vector<8x32xf32>
    %31 = tpu.concatenate %29, %30 in 0 : vector<16x32xf32>, vector<8x32xf32> -> vector<24x32xf32>
    %32 = vector.extract_strided_slice %25 {offsets = [0, 0], sizes = [8, 8], strides = [1, 1]} : vector<8x32xf32> to vector<8x8xf32>
    %33 = vector.extract_strided_slice %28 {offsets = [0, 0], sizes = [24, 8], strides = [1, 1]} : vector<24x32xf32> to vector<24x8xf32>
    %cst_10 = arith.constant dense<0.000000e+00> : vector<8x24xf32>
    %34 = tpu.matmul %32, %33, %cst_10 {dimension_numbers = #tpu.dot_dimension_numbers<[1], [1], [0], [0], [0, 0, 1, 0], [], []>} : vector<8x8xf32>, vector<24x8xf32>, vector<8x24xf32> -> vector<8x24xf32>
    %cst_11 = arith.constant 0.353553385 : f32
    %35 = vector.broadcast %cst_11 : f32 to vector<8x24xf32>
    %36 = arith.mulf %34, %35 : vector<8x24xf32>
    %cst_12 = arith.constant dense<0xFF800000> : vector<8xf32>
    %37 = vector.multi_reduction <maximumf>, %36, %cst_12 [1] : vector<8x24xf32> to vector<8xf32>
    %38 = vector.shape_cast %37 : vector<8xf32> to vector<8x1xf32>
    %39 = vector.broadcast %38 : vector<8x1xf32> to vector<8x24xf32>
    %40 = arith.subf %36, %39 : vector<8x24xf32>
    %41 = math.exp %40 : vector<8x24xf32>
    %cst_13 = arith.constant dense<0.000000e+00> : vector<8xf32>
    %42 = vector.multi_reduction <add>, %41, %cst_13 [1] : vector<8x24xf32> to vector<8xf32>
    %43 = vector.shape_cast %42 : vector<8xf32> to vector<8x1xf32>
    %44 = tpu.reciprocal %43 {approx = true} : vector<8x1xf32> -> vector<8x1xf32>
    %45 = vector.broadcast %44 : vector<8x1xf32> to vector<8x24xf32>
    %46 = arith.mulf %41, %45 : vector<8x24xf32>
    %47 = vector.extract_strided_slice %31 {offsets = [0, 0], sizes = [24, 8], strides = [1, 1]} : vector<24x32xf32> to vector<24x8xf32>
    %cst_14 = arith.constant dense<0.000000e+00> : vector<8x8xf32>
    %48 = tpu.matmul %46, %47, %cst_14 {dimension_numbers = #tpu.dot_dimension_numbers<[1], [0], [0], [1], [0, 0, 1, 1], [], []>} : vector<8x24xf32>, vector<24x8xf32>, vector<8x8xf32> -> vector<8x8xf32>
    %c0_15 = arith.constant 0 : index
    %c0_16 = arith.constant 0 : index
    %49 = vector.load %arg7[%c0_15, %c0_16] : memref<16x32xf32, #tpu.memory_space<vmem>>, vector<8x8xf32>
    tpu.vector_store %arg7[%c0_15, %c0_16], %48 {strides = array<i32>} : memref<16x32xf32, #tpu.memory_space<vmem>>, vector<8x8xf32>,
    %50 = vector.extract_strided_slice %25 {offsets = [0, 8], sizes = [8, 8], strides = [1, 1]} : vector<8x32xf32> to vector<8x8xf32>
    %51 = vector.extract_strided_slice %28 {offsets = [0, 8], sizes = [24, 8], strides = [1, 1]} : vector<24x32xf32> to vector<24x8xf32>
    %cst_17 = arith.constant dense<0.000000e+00> : vector<8x24xf32>
    %52 = tpu.matmul %50, %51, %cst_17 {dimension_numbers = #tpu.dot_dimension_numbers<[1], [1], [0], [0], [0, 0, 1, 0], [], []>} : vector<8x8xf32>, vector<24x8xf32>, vector<8x24xf32> -> vector<8x24xf32>
    %cst_18 = arith.constant 0.353553385 : f32
    %53 = vector.broadcast %cst_18 : f32 to vector<8x24xf32>
    %54 = arith.mulf %52, %53 : vector<8x24xf32>
    %cst_19 = arith.constant dense<0xFF800000> : vector<8xf32>
    %55 = vector.multi_reduction <maximumf>, %54, %cst_19 [1] : vector<8x24xf32> to vector<8xf32>
    %56 = vector.shape_cast %55 : vector<8xf32> to vector<8x1xf32>
    %57 = vector.broadcast %56 : vector<8x1xf32> to vector<8x24xf32>
    %58 = arith.subf %54, %57 : vector<8x24xf32>
    %59 = math.exp %58 : vector<8x24xf32>
    %cst_20 = arith.constant dense<0.000000e+00> : vector<8xf32>
    %60 = vector.multi_reduction <add>, %59, %cst_20 [1] : vector<8x24xf32> to vector<8xf32>
    %61 = vector.shape_cast %60 : vector<8xf32> to vector<8x1xf32>
    %62 = tpu.reciprocal %61 {approx = true} : vector<8x1xf32> -> vector<8x1xf32>
    %63 = vector.broadcast %62 : vector<8x1xf32> to vector<8x24xf32>
    %64 = arith.mulf %59, %63 : vector<8x24xf32>
    %65 = vector.extract_strided_slice %31 {offsets = [0, 8], sizes = [24, 8], strides = [1, 1]} : vector<24x32xf32> to vector<24x8xf32>
    %cst_21 = arith.constant dense<0.000000e+00> : vector<8x8xf32>
    %66 = tpu.matmul %64, %65, %cst_21 {dimension_numbers = #tpu.dot_dimension_numbers<[1], [0], [0], [1], [0, 0, 1, 1], [], []>} : vector<8x24xf32>, vector<24x8xf32>, vector<8x8xf32> -> vector<8x8xf32>
    %c0_22 = arith.constant 0 : index
    %c8 = arith.constant 8 : index
    %67 = vector.load %arg7[%c0_22, %c8] : memref<16x32xf32, #tpu.memory_space<vmem>>, vector<8x8xf32>
    tpu.vector_store %arg7[%c0_22, %c8], %66 {strides = array<i32>} : memref<16x32xf32, #tpu.memory_space<vmem>>, vector<8x8xf32>,
    %68 = vector.extract_strided_slice %25 {offsets = [0, 16], sizes = [8, 8], strides = [1, 1]} : vector<8x32xf32> to vector<8x8xf32>
    %69 = vector.extract_strided_slice %28 {offsets = [0, 16], sizes = [24, 8], strides = [1, 1]} : vector<24x32xf32> to vector<24x8xf32>
    %cst_23 = arith.constant dense<0.000000e+00> : vector<8x24xf32>
    %70 = tpu.matmul %68, %69, %cst_23 {dimension_numbers = #tpu.dot_dimension_numbers<[1], [1], [0], [0], [0, 0, 1, 0], [], []>} : vector<8x8xf32>, vector<24x8xf32>, vector<8x24xf32> -> vector<8x24xf32>
    %cst_24 = arith.constant 0.353553385 : f32
    %71 = vector.broadcast %cst_24 : f32 to vector<8x24xf32>
    %72 = arith.mulf %70, %71 : vector<8x24xf32>
    %cst_25 = arith.constant dense<0xFF800000> : vector<8xf32>
    %73 = vector.multi_reduction <maximumf>, %72, %cst_25 [1] : vector<8x24xf32> to vector<8xf32>
    %74 = vector.shape_cast %73 : vector<8xf32> to vector<8x1xf32>
    %75 = vector.broadcast %74 : vector<8x1xf32> to vector<8x24xf32>
    %76 = arith.subf %72, %75 : vector<8x24xf32>
    %77 = math.exp %76 : vector<8x24xf32>
    %cst_26 = arith.constant dense<0.000000e+00> : vector<8xf32>
    %78 = vector.multi_reduction <add>, %77, %cst_26 [1] : vector<8x24xf32> to vector<8xf32>
    %79 = vector.shape_cast %78 : vector<8xf32> to vector<8x1xf32>
    %80 = tpu.reciprocal %79 {approx = true} : vector<8x1xf32> -> vector<8x1xf32>
    %81 = vector.broadcast %80 : vector<8x1xf32> to vector<8x24xf32>
    %82 = arith.mulf %77, %81 : vector<8x24xf32>
    %83 = vector.extract_strided_slice %31 {offsets = [0, 16], sizes = [24, 8], strides = [1, 1]} : vector<24x32xf32> to vector<24x8xf32>
    %cst_27 = arith.constant dense<0.000000e+00> : vector<8x8xf32>
    %84 = tpu.matmul %82, %83, %cst_27 {dimension_numbers = #tpu.dot_dimension_numbers<[1], [0], [0], [1], [0, 0, 1, 1], [], []>} : vector<8x24xf32>, vector<24x8xf32>, vector<8x8xf32> -> vector<8x8xf32>
    %c0_28 = arith.constant 0 : index
    %c16 = arith.constant 16 : index
    %85 = vector.load %arg7[%c0_28, %c16] : memref<16x32xf32, #tpu.memory_space<vmem>>, vector<8x8xf32>
    tpu.vector_store %arg7[%c0_28, %c16], %84 {strides = array<i32>} : memref<16x32xf32, #tpu.memory_space<vmem>>, vector<8x8xf32>,
    %86 = vector.extract_strided_slice %25 {offsets = [0, 24], sizes = [8, 8], strides = [1, 1]} : vector<8x32xf32> to vector<8x8xf32>
    %87 = vector.extract_strided_slice %28 {offsets = [0, 24], sizes = [24, 8], strides = [1, 1]} : vector<24x32xf32> to vector<24x8xf32>
    %cst_29 = arith.constant dense<0.000000e+00> : vector<8x24xf32>
    %88 = tpu.matmul %86, %87, %cst_29 {dimension_numbers = #tpu.dot_dimension_numbers<[1], [1], [0], [0], [0, 0, 1, 0], [], []>} : vector<8x8xf32>, vector<24x8xf32>, vector<8x24xf32> -> vector<8x24xf32>
    %cst_30 = arith.constant 0.353553385 : f32
    %89 = vector.broadcast %cst_30 : f32 to vector<8x24xf32>
    %90 = arith.mulf %88, %89 : vector<8x24xf32>
    %cst_31 = arith.constant dense<0xFF800000> : vector<8xf32>
    %91 = vector.multi_reduction <maximumf>, %90, %cst_31 [1] : vector<8x24xf32> to vector<8xf32>
    %92 = vector.shape_cast %91 : vector<8xf32> to vector<8x1xf32>
    %93 = vector.broadcast %92 : vector<8x1xf32> to vector<8x24xf32>
    %94 = arith.subf %90, %93 : vector<8x24xf32>
    %95 = math.exp %94 : vector<8x24xf32>
    %cst_32 = arith.constant dense<0.000000e+00> : vector<8xf32>
    %96 = vector.multi_reduction <add>, %95, %cst_32 [1] : vector<8x24xf32> to vector<8xf32>
    %97 = vector.shape_cast %96 : vector<8xf32> to vector<8x1xf32>
    %98 = tpu.reciprocal %97 {approx = true} : vector<8x1xf32> -> vector<8x1xf32>
    %99 = vector.broadcast %98 : vector<8x1xf32> to vector<8x24xf32>
    %100 = arith.mulf %95, %99 : vector<8x24xf32>
    %101 = vector.extract_strided_slice %31 {offsets = [0, 24], sizes = [24, 8], strides = [1, 1]} : vector<24x32xf32> to vector<24x8xf32>
    %cst_33 = arith.constant dense<0.000000e+00> : vector<8x8xf32>
    %102 = tpu.matmul %100, %101, %cst_33 {dimension_numbers = #tpu.dot_dimension_numbers<[1], [0], [0], [1], [0, 0, 1, 1], [], []>} : vector<8x24xf32>, vector<24x8xf32>, vector<8x8xf32> -> vector<8x8xf32>
    %c0_34 = arith.constant 0 : index
    %c24 = arith.constant 24 : index
    %103 = vector.load %arg7[%c0_34, %c24] : memref<16x32xf32, #tpu.memory_space<vmem>>, vector<8x8xf32>
    tpu.vector_store %arg7[%c0_34, %c24], %102 {strides = array<i32>} : memref<16x32xf32, #tpu.memory_space<vmem>>, vector<8x8xf32>,
    %104 = vector.extract_strided_slice %21 {offsets = [8, 0], sizes = [8, 32], strides = [1, 1]} : vector<16x96xf32> to vector<8x32xf32>
    %105 = vector.extract_strided_slice %24 {offsets = [16, 0], sizes = [16, 32], strides = [1, 1]} : vector<32x64xf32> to vector<16x32xf32>
    %106 = vector.extract_strided_slice %21 {offsets = [8, 32], sizes = [8, 32], strides = [1, 1]} : vector<16x96xf32> to vector<8x32xf32>
    %107 = tpu.concatenate %105, %106 in 0 : vector<16x32xf32>, vector<8x32xf32> -> vector<24x32xf32>
    %108 = vector.extract_strided_slice %24 {offsets = [16, 32], sizes = [16, 32], strides = [1, 1]} : vector<32x64xf32> to vector<16x32xf32>
    %109 = vector.extract_strided_slice %21 {offsets = [8, 64], sizes = [8, 32], strides = [1, 1]} : vector<16x96xf32> to vector<8x32xf32>
    %110 = tpu.concatenate %108, %109 in 0 : vector<16x32xf32>, vector<8x32xf32> -> vector<24x32xf32>
    %111 = vector.extract_strided_slice %104 {offsets = [0, 0], sizes = [8, 8], strides = [1, 1]} : vector<8x32xf32> to vector<8x8xf32>
    %112 = vector.extract_strided_slice %107 {offsets = [0, 0], sizes = [24, 8], strides = [1, 1]} : vector<24x32xf32> to vector<24x8xf32>
    %cst_35 = arith.constant dense<0.000000e+00> : vector<8x24xf32>
    %113 = tpu.matmul %111, %112, %cst_35 {dimension_numbers = #tpu.dot_dimension_numbers<[1], [1], [0], [0], [0, 0, 1, 0], [], []>} : vector<8x8xf32>, vector<24x8xf32>, vector<8x24xf32> -> vector<8x24xf32>
    %cst_36 = arith.constant 0.353553385 : f32
    %114 = vector.broadcast %cst_36 : f32 to vector<8x24xf32>
    %115 = arith.mulf %113, %114 : vector<8x24xf32>
    %cst_37 = arith.constant dense<0xFF800000> : vector<8xf32>
    %116 = vector.multi_reduction <maximumf>, %115, %cst_37 [1] : vector<8x24xf32> to vector<8xf32>
    %117 = vector.shape_cast %116 : vector<8xf32> to vector<8x1xf32>
    %118 = vector.broadcast %117 : vector<8x1xf32> to vector<8x24xf32>
    %119 = arith.subf %115, %118 : vector<8x24xf32>
    %120 = math.exp %119 : vector<8x24xf32>
    %cst_38 = arith.constant dense<0.000000e+00> : vector<8xf32>
    %121 = vector.multi_reduction <add>, %120, %cst_38 [1] : vector<8x24xf32> to vector<8xf32>
    %122 = vector.shape_cast %121 : vector<8xf32> to vector<8x1xf32>
    %123 = tpu.reciprocal %122 {approx = true} : vector<8x1xf32> -> vector<8x1xf32>
    %124 = vector.broadcast %123 : vector<8x1xf32> to vector<8x24xf32>
    %125 = arith.mulf %120, %124 : vector<8x24xf32>
    %126 = vector.extract_strided_slice %110 {offsets = [0, 0], sizes = [24, 8], strides = [1, 1]} : vector<24x32xf32> to vector<24x8xf32>
    %cst_39 = arith.constant dense<0.000000e+00> : vector<8x8xf32>
    %127 = tpu.matmul %125, %126, %cst_39 {dimension_numbers = #tpu.dot_dimension_numbers<[1], [0], [0], [1], [0, 0, 1, 1], [], []>} : vector<8x24xf32>, vector<24x8xf32>, vector<8x8xf32> -> vector<8x8xf32>
    %c8_40 = arith.constant 8 : index
    %c0_41 = arith.constant 0 : index
    %128 = vector.load %arg7[%c8_40, %c0_41] : memref<16x32xf32, #tpu.memory_space<vmem>>, vector<8x8xf32>
    tpu.vector_store %arg7[%c8_40, %c0_41], %127 {strides = array<i32>} : memref<16x32xf32, #tpu.memory_space<vmem>>, vector<8x8xf32>,
    %129 = vector.extract_strided_slice %104 {offsets = [0, 8], sizes = [8, 8], strides = [1, 1]} : vector<8x32xf32> to vector<8x8xf32>
    %130 = vector.extract_strided_slice %107 {offsets = [0, 8], sizes = [24, 8], strides = [1, 1]} : vector<24x32xf32> to vector<24x8xf32>
    %cst_42 = arith.constant dense<0.000000e+00> : vector<8x24xf32>
    %131 = tpu.matmul %129, %130, %cst_42 {dimension_numbers = #tpu.dot_dimension_numbers<[1], [1], [0], [0], [0, 0, 1, 0], [], []>} : vector<8x8xf32>, vector<24x8xf32>, vector<8x24xf32> -> vector<8x24xf32>
    %cst_43 = arith.constant 0.353553385 : f32
    %132 = vector.broadcast %cst_43 : f32 to vector<8x24xf32>
    %133 = arith.mulf %131, %132 : vector<8x24xf32>
    %cst_44 = arith.constant dense<0xFF800000> : vector<8xf32>
    %134 = vector.multi_reduction <maximumf>, %133, %cst_44 [1] : vector<8x24xf32> to vector<8xf32>
    %135 = vector.shape_cast %134 : vector<8xf32> to vector<8x1xf32>
    %136 = vector.broadcast %135 : vector<8x1xf32> to vector<8x24xf32>
    %137 = arith.subf %133, %136 : vector<8x24xf32>
    %138 = math.exp %137 : vector<8x24xf32>
    %cst_45 = arith.constant dense<0.000000e+00> : vector<8xf32>
    %139 = vector.multi_reduction <add>, %138, %cst_45 [1] : vector<8x24xf32> to vector<8xf32>
    %140 = vector.shape_cast %139 : vector<8xf32> to vector<8x1xf32>
    %141 = tpu.reciprocal %140 {approx = true} : vector<8x1xf32> -> vector<8x1xf32>
    %142 = vector.broadcast %141 : vector<8x1xf32> to vector<8x24xf32>
    %143 = arith.mulf %138, %142 : vector<8x24xf32>
    %144 = vector.extract_strided_slice %110 {offsets = [0, 8], sizes = [24, 8], strides = [1, 1]} : vector<24x32xf32> to vector<24x8xf32>
    %cst_46 = arith.constant dense<0.000000e+00> : vector<8x8xf32>
    %145 = tpu.matmul %143, %144, %cst_46 {dimension_numbers = #tpu.dot_dimension_numbers<[1], [0], [0], [1], [0, 0, 1, 1], [], []>} : vector<8x24xf32>, vector<24x8xf32>, vector<8x8xf32> -> vector<8x8xf32>
    %c8_47 = arith.constant 8 : index
    %c8_48 = arith.constant 8 : index
    %146 = vector.load %arg7[%c8_47, %c8_48] : memref<16x32xf32, #tpu.memory_space<vmem>>, vector<8x8xf32>
    tpu.vector_store %arg7[%c8_47, %c8_48], %145 {strides = array<i32>} : memref<16x32xf32, #tpu.memory_space<vmem>>, vector<8x8xf32>,
    %147 = vector.extract_strided_slice %104 {offsets = [0, 16], sizes = [8, 8], strides = [1, 1]} : vector<8x32xf32> to vector<8x8xf32>
    %148 = vector.extract_strided_slice %107 {offsets = [0, 16], sizes = [24, 8], strides = [1, 1]} : vector<24x32xf32> to vector<24x8xf32>
    %cst_49 = arith.constant dense<0.000000e+00> : vector<8x24xf32>
    %149 = tpu.matmul %147, %148, %cst_49 {dimension_numbers = #tpu.dot_dimension_numbers<[1], [1], [0], [0], [0, 0, 1, 0], [], []>} : vector<8x8xf32>, vector<24x8xf32>, vector<8x24xf32> -> vector<8x24xf32>
    %cst_50 = arith.constant 0.353553385 : f32
    %150 = vector.broadcast %cst_50 : f32 to vector<8x24xf32>
    %151 = arith.mulf %149, %150 : vector<8x24xf32>
    %cst_51 = arith.constant dense<0xFF800000> : vector<8xf32>
    %152 = vector.multi_reduction <maximumf>, %151, %cst_51 [1] : vector<8x24xf32> to vector<8xf32>
    %153 = vector.shape_cast %152 : vector<8xf32> to vector<8x1xf32>
    %154 = vector.broadcast %153 : vector<8x1xf32> to vector<8x24xf32>
    %155 = arith.subf %151, %154 : vector<8x24xf32>
    %156 = math.exp %155 : vector<8x24xf32>
    %cst_52 = arith.constant dense<0.000000e+00> : vector<8xf32>
    %157 = vector.multi_reduction <add>, %156, %cst_52 [1] : vector<8x24xf32> to vector<8xf32>
    %158 = vector.shape_cast %157 : vector<8xf32> to vector<8x1xf32>
    %159 = tpu.reciprocal %158 {approx = true} : vector<8x1xf32> -> vector<8x1xf32>
    %160 = vector.broadcast %159 : vector<8x1xf32> to vector<8x24xf32>
    %161 = arith.mulf %156, %160 : vector<8x24xf32>
    %162 = vector.extract_strided_slice %110 {offsets = [0, 16], sizes = [24, 8], strides = [1, 1]} : vector<24x32xf32> to vector<24x8xf32>
    %cst_53 = arith.constant dense<0.000000e+00> : vector<8x8xf32>
    %163 = tpu.matmul %161, %162, %cst_53 {dimension_numbers = #tpu.dot_dimension_numbers<[1], [0], [0], [1], [0, 0, 1, 1], [], []>} : vector<8x24xf32>, vector<24x8xf32>, vector<8x8xf32> -> vector<8x8xf32>
    %c8_54 = arith.constant 8 : index
    %c16_55 = arith.constant 16 : index
    %164 = vector.load %arg7[%c8_54, %c16_55] : memref<16x32xf32, #tpu.memory_space<vmem>>, vector<8x8xf32>
    tpu.vector_store %arg7[%c8_54, %c16_55], %163 {strides = array<i32>} : memref<16x32xf32, #tpu.memory_space<vmem>>, vector<8x8xf32>,
    %165 = vector.extract_strided_slice %104 {offsets = [0, 24], sizes = [8, 8], strides = [1, 1]} : vector<8x32xf32> to vector<8x8xf32>
    %166 = vector.extract_strided_slice %107 {offsets = [0, 24], sizes = [24, 8], strides = [1, 1]} : vector<24x32xf32> to vector<24x8xf32>
    %cst_56 = arith.constant dense<0.000000e+00> : vector<8x24xf32>
    %167 = tpu.matmul %165, %166, %cst_56 {dimension_numbers = #tpu.dot_dimension_numbers<[1], [1], [0], [0], [0, 0, 1, 0], [], []>} : vector<8x8xf32>, vector<24x8xf32>, vector<8x24xf32> -> vector<8x24xf32>
    %cst_57 = arith.constant 0.353553385 : f32
    %168 = vector.broadcast %cst_57 : f32 to vector<8x24xf32>
    %169 = arith.mulf %167, %168 : vector<8x24xf32>
    %cst_58 = arith.constant dense<0xFF800000> : vector<8xf32>
    %170 = vector.multi_reduction <maximumf>, %169, %cst_58 [1] : vector<8x24xf32> to vector<8xf32>
    %171 = vector.shape_cast %170 : vector<8xf32> to vector<8x1xf32>
    %172 = vector.broadcast %171 : vector<8x1xf32> to vector<8x24xf32>
    %173 = arith.subf %169, %172 : vector<8x24xf32>
    %174 = math.exp %173 : vector<8x24xf32>
    %cst_59 = arith.constant dense<0.000000e+00> : vector<8xf32>
    %175 = vector.multi_reduction <add>, %174, %cst_59 [1] : vector<8x24xf32> to vector<8xf32>
    %176 = vector.shape_cast %175 : vector<8xf32> to vector<8x1xf32>
    %177 = tpu.reciprocal %176 {approx = true} : vector<8x1xf32> -> vector<8x1xf32>
    %178 = vector.broadcast %177 : vector<8x1xf32> to vector<8x24xf32>
    %179 = arith.mulf %174, %178 : vector<8x24xf32>
    %180 = vector.extract_strided_slice %110 {offsets = [0, 24], sizes = [24, 8], strides = [1, 1]} : vector<24x32xf32> to vector<24x8xf32>
    %cst_60 = arith.constant dense<0.000000e+00> : vector<8x8xf32>
    %181 = tpu.matmul %179, %180, %cst_60 {dimension_numbers = #tpu.dot_dimension_numbers<[1], [0], [0], [1], [0, 0, 1, 1], [], []>} : vector<8x24xf32>, vector<24x8xf32>, vector<8x8xf32> -> vector<8x8xf32>
    %c8_61 = arith.constant 8 : index
    %c24_62 = arith.constant 24 : index
    %182 = vector.load %arg7[%c8_61, %c24_62] : memref<16x32xf32, #tpu.memory_space<vmem>>, vector<8x8xf32>
    tpu.vector_store %arg7[%c8_61, %c24_62], %181 {strides = array<i32>} : memref<16x32xf32, #tpu.memory_space<vmem>>, vector<8x8xf32>,
    %c0_63 = arith.constant 0 : index
    %c0_64 = arith.constant 0 : index
    %183 = vector.load %arg7[%c0_63, %c0_64] : memref<16x32xf32, #tpu.memory_space<vmem>>, vector<16x32xf32>
    %cst_65 = arith.constant dense<0.000000e+00> : vector<16x32xf32>
    %184 = tpu.matmul %183, %7, %cst_65 {dimension_numbers = #tpu.dot_dimension_numbers<[1], [0], [0], [1], [0, 0, 1, 1], [], []>} : vector<16x32xf32>, vector<32x32xf32>, vector<16x32xf32> -> vector<16x32xf32>
    %185 = vector.broadcast %12 : vector<1x32xf32> to vector<16x32xf32>
    %186 = arith.addf %184, %185 : vector<16x32xf32>
    %187 = arith.addf %3, %186 : vector<16x32xf32>
    %cst_66 = arith.constant dense<0.000000e+00> : vector<16xf32>
    %188 = vector.multi_reduction <add>, %187, %cst_66 [1] : vector<16x32xf32> to vector<16xf32>
    %189 = vector.shape_cast %188 : vector<16xf32> to vector<16x1xf32>
    %cst_67 = arith.constant 3.200000e+01 : f32
    %190 = vector.broadcast %cst_67 : f32 to vector<16x1xf32>
    %191 = arith.divf %189, %190 : vector<16x1xf32>
    %192 = vector.broadcast %191 : vector<16x1xf32> to vector<16x32xf32>
    %193 = arith.subf %187, %192 : vector<16x32xf32>
    %194 = arith.mulf %193, %193 : vector<16x32xf32>
    %cst_68 = arith.constant dense<0.000000e+00> : vector<16xf32>
    %195 = vector.multi_reduction <add>, %194, %cst_68 [1] : vector<16x32xf32> to vector<16xf32>
    %196 = vector.shape_cast %195 : vector<16xf32> to vector<16x1xf32>
    %cst_69 = arith.constant 3.200000e+01 : f32
    %197 = vector.broadcast %cst_69 : f32 to vector<16x1xf32>
    %198 = arith.divf %196, %197 : vector<16x1xf32>
    %199 = vector.broadcast %191 : vector<16x1xf32> to vector<16x32xf32>
    %200 = arith.subf %187, %199 : vector<16x32xf32>
    %cst_70 = arith.constant 9.99999974E-6 : f32
    %201 = vector.broadcast %cst_70 : f32 to vector<16x1xf32>
    %202 = arith.addf %198, %201 : vector<16x1xf32>
    %203 = math.rsqrt %202 : vector<16x1xf32>
    %204 = vector.broadcast %203 : vector<16x1xf32> to vector<16x32xf32>
    %205 = arith.mulf %200, %204 : vector<16x32xf32>
    %206 = vector.broadcast %13 : vector<1x32xf32> to vector<16x32xf32>
    %207 = arith.mulf %205, %206 : vector<16x32xf32>
    %208 = vector.broadcast %14 : vector<1x32xf32> to vector<16x32xf32>
    %209 = arith.addf %207, %208 : vector<16x32xf32>
    %cst_71 = arith.constant dense<0.000000e+00> : vector<16x64xf32>
    %210 = tpu.matmul %209, %8, %cst_71 {dimension_numbers = #tpu.dot_dimension_numbers<[1], [0], [0], [1], [0, 0, 1, 1], [], []>} : vector<16x32xf32>, vector<32x64xf32>, vector<16x64xf32> -> vector<16x64xf32>
    %211 = vector.broadcast %15 : vector<1x64xf32> to vector<16x64xf32>
    %212 = arith.addf %210, %211 : vector<16x64xf32>
    %cst_72 = arith.constant 0.000000e+00 : f32
    %213 = vector.broadcast %cst_72 : f32 to vector<16x64xf32>
    %214 = arith.maximumf %212, %213 : vector<16x64xf32>
    %c0_73 = arith.constant 0 : index
    %c0_74 = arith.constant 0 : index
    %215 = vector.load %arg4[%c0_73, %c0_74] : memref<64x32xf32, #tpu.memory_space<vmem>>, vector<64x32xf32>
    %cst_75 = arith.constant dense<0.000000e+00> : vector<16x32xf32>
    %216 = tpu.matmul %214, %215, %cst_75 {dimension_numbers = #tpu.dot_dimension_numbers<[1], [0], [0], [1], [0, 0, 1, 1], [], []>} : vector<16x64xf32>, vector<64x32xf32>, vector<16x32xf32> -> vector<16x32xf32>
    %217 = vector.broadcast %16 : vector<1x32xf32> to vector<16x32xf32>
    %218 = arith.addf %216, %217 : vector<16x32xf32>
    %219 = arith.addf %209, %218 : vector<16x32xf32>
    %cst_76 = arith.constant dense<0.000000e+00> : vector<16xf32>
    %220 = vector.multi_reduction <add>, %219, %cst_76 [1] : vector<16x32xf32> to vector<16xf32>
    %221 = vector.shape_cast %220 : vector<16xf32> to vector<16x1xf32>
    %cst_77 = arith.constant 3.200000e+01 : f32
    %222 = vector.broadcast %cst_77 : f32 to vector<16x1xf32>
    %223 = arith.divf %221, %222 : vector<16x1xf32>
    %224 = vector.broadcast %223 : vector<16x1xf32> to vector<16x32xf32>
    %225 = arith.subf %219, %224 : vector<16x32xf32>
    %226 = arith.mulf %225, %225 : vector<16x32xf32>
    %cst_78 = arith.constant dense<0.000000e+00> : vector<16xf32>
    %227 = vector.multi_reduction <add>, %226, %cst_78 [1] : vector<16x32xf32> to vector<16xf32>
    %228 = vector.shape_cast %227 : vector<16xf32> to vector<16x1xf32>
    %cst_79 = arith.constant 3.200000e+01 : f32
    %229 = vector.broadcast %cst_79 : f32 to vector<16x1xf32>
    %230 = arith.divf %228, %229 : vector<16x1xf32>
    %231 = vector.broadcast %223 : vector<16x1xf32> to vector<16x32xf32>
    %232 = arith.subf %219, %231 : vector<16x32xf32>
    %cst_80 = arith.constant 9.99999974E-6 : f32
    %233 = vector.broadcast %cst_80 : f32 to vector<16x1xf32>
    %234 = arith.addf %230, %233 : vector<16x1xf32>
    %235 = math.rsqrt %234 : vector<16x1xf32>
    %236 = vector.broadcast %235 : vector<16x1xf32> to vector<16x32xf32>
    %237 = arith.mulf %232, %236 : vector<16x32xf32>
    %238 = vector.broadcast %17 : vector<1x32xf32> to vector<16x32xf32>
    %239 = arith.mulf %237, %238 : vector<16x32xf32>
    %240 = vector.broadcast %18 : vector<1x32xf32> to vector<16x32xf32>
    %241 = arith.addf %239, %240 : vector<16x32xf32>
    %c0_81 = arith.constant 0 : index
    %c0_82 = arith.constant 0 : index
    %242 = vector.load %arg6[%c0_81, %c0_82] : memref<16x32xf32, #tpu.memory_space<vmem>>, vector<16x32xf32>
    tpu.vector_store %arg6[%c0_81, %c0_82], %241 {strides = array<i32>} : memref<16x32xf32, #tpu.memory_space<vmem>>, vector<16x32xf32>,
    return
  }
  func.func @transform_0(%arg0: i32) -> (i32, i32, i32) {
    %c0_i32 = arith.constant 0 : i32
    %c0_i32_0 = arith.constant 0 : i32
    %c0_i32_1 = arith.constant 0 : i32
    %c0_i32_2 = arith.constant 0 : i32
    return %c0_i32, %c0_i32_0, %c0_i32_1 : i32, i32, i32
  }
  func.func @transform_1(%arg0: i32) -> (i32, i32, i32) {
    %c0_i32 = arith.constant 0 : i32
    %c0_i32_0 = arith.constant 0 : i32
    %c0_i32_1 = arith.constant 0 : i32
    %c0_i32_2 = arith.constant 0 : i32
    return %c0_i32, %c0_i32_0, %c0_i32_1 : i32, i32, i32
  }
  func.func @transform_2(%arg0: i32) -> (i32, i32) {
    %c0_i32 = arith.constant 0 : i32
    %c0_i32_0 = arith.constant 0 : i32
    %c0_i32_1 = arith.constant 0 : i32
    return %c0_i32, %c0_i32_0 : i32, i32
  }
  func.func @transform_3(%arg0: i32) -> (i32, i32) {
    %c0_i32 = arith.constant 0 : i32
    %c0_i32_0 = arith.constant 0 : i32
    %c0_i32_1 = arith.constant 0 : i32
    return %c0_i32, %c0_i32_0 : i32, i32
  }
  func.func @transform_4(%arg0: i32) -> (i32, i32) {
    %c0_i32 = arith.constant 0 : i32
    %c0_i32_0 = arith.constant 0 : i32
    %c0_i32_1 = arith.constant 0 : i32
    return %c0_i32, %c0_i32_0 : i32, i32
  }
  func.func @transform_5(%arg0: i32) -> (i32, i32) {
    %c0_i32 = arith.constant 0 : i32
    %c0_i32_0 = arith.constant 0 : i32
    %c0_i32_1 = arith.constant 0 : i32
    return %c0_i32, %c0_i32_0 : i32, i32
  }
}

</mosaic_0001>

<llo_original>
// kernel: tpu_custom_call.1
$region0: #{tpu_custom_call.1}
  #allocation0 [shape = 'u32[]', space=smem, size = 0x4, offset = 0x4, fixed_abs, tag = 'smem constant byte address 0x4 - core index']
  #allocation1 [shape = 'u32[144,128]{1,0:T(1,128)}', space=vmem, size = 0x12000, scoped, tag = 'internal scratch']
  #allocation2 [shape = 'f32[16,32]{1,0:T(8,128)}', space=vmem, size = 0x2000, scoped, tag = 'scratch operand']
  %s0 = inlined_call_operand.vmem [shape: f32[2,16,32], index: 0, kind: input, shape index: {}]
  %s1 = inlined_call_operand.hbm [shape: f32[2,8,32], index: 1, kind: input, shape index: {}]
  %s2 = inlined_call_operand.vmem [shape: f32[32,192], index: 2, kind: input, shape index: {}]
  %s3 = inlined_call_operand.vmem [shape: f32[64,32], index: 3, kind: input, shape index: {}]
  %s4 = inlined_call_operand.vmem [shape: f32[4,96], index: 4, kind: input, shape index: {}]
  %s5 = inlined_call_operand.hbm [shape: f32[16,32], index: 5, kind: output, shape index: {}]
  %s6 = sld [smem:[#allocation0]]
  $region34: #{tpu_custom_call.1} parent=0
    _
  %s8 = ssub.s32 1, %s6
  %s9 = scalar_select 0, %s8, %s6
  $region1: #{tpu_custom_call.1} parent=0
    #allocation3 [shape = 'u8[8192]{0}', space=vmem, size = 0x2000, scoped, tag = 'input window, operand 1, single buffered']
    #allocation4 [shape = 's32[1]{0}', space=sflag, size = 0x4, scoped, tag = 'scoped memory for tpu_custom_call.1']
    #allocation5 [shape = 's32[1]{0}', space=sflag, size = 0x4, scoped, tag = 'scoped memory for tpu_custom_call.1']
    #allocation6 [shape = 'u8[8192]{0}', space=vmem, size = 0x2000, scoped, tag = 'output window, operand 0, single buffered']
    %10 = vsyncpa [#allocation4], 0
    %11 = vsyncpa [#allocation5], 0
    // Predicated region
    $region2: #{tpu_custom_call.1} parent=1 // pred_check
      _
    $region3: #{tpu_custom_call.1} parent=1 // pred_check_branch
      %13 = sbr.rel (0) target = $region5
    $region4: #{tpu_custom_call.1} parent=1 // pred_region
      _
    $region5: #{tpu_custom_call.1} parent=1 // pred_fallthru
      _
    // Predicated region
    $region6: #{tpu_custom_call.1} parent=1 // pred_check
      _
    $region7: #{tpu_custom_call.1} parent=1 // pred_check_branch
      %15 = sbr.rel (0) target = $region9
    $region8: #{tpu_custom_call.1} parent=1 // pred_region
      %s17 = ssub.s32 256, 256
      %18 = vsyncadd [#allocation4], %s17
      %s19 = sshll.u32 [#allocation3], 4
      %s20 = int_to_ptr.vmem [resolvable:$true] %s19
      %25 = dma.hbm_to_vmem [thread:$0]  %s1, 256, %s20, [#allocation4], 128, 128, 8
    $region9: #{tpu_custom_call.1} parent=1 // pred_fallthru
      _
    // Predicated region
    $region10: #{tpu_custom_call.1} parent=1 // pred_check
      _
    $region11: #{tpu_custom_call.1} parent=1 // pred_check_branch
      %27 = sbr.rel (0) target = $region13
    $region12: #{tpu_custom_call.1} parent=1 // pred_region
      _
    $region13: #{tpu_custom_call.1} parent=1 // pred_fallthru
      _
    // Predicated region
    $region14: #{tpu_custom_call.1} parent=1 // pred_check
      _
    $region15: #{tpu_custom_call.1} parent=1 // pred_check_branch
      %29 = sbr.rel (0) target = $region17
    $region16: #{tpu_custom_call.1} parent=1 // pred_region
      _
    $region17: #{tpu_custom_call.1} parent=1 // pred_fallthru
      _
    // Predicated region
    $region18: #{tpu_custom_call.1} parent=1 // pred_check
      _
    $region19: #{tpu_custom_call.1} parent=1 // pred_check_branch
      %31 = sbr.rel (0) target = $region21
    $region20: #{tpu_custom_call.1} parent=1 // pred_region
      _
    $region21: #{tpu_custom_call.1} parent=1 // pred_fallthru
      _
    // Predicated region
    $region22: #{tpu_custom_call.1} parent=1 // pred_check
      _
    $region23: #{tpu_custom_call.1} parent=1 // pred_check_branch
      %33 = sbr.rel (0) target = $region25
    $region24: #{tpu_custom_call.1} parent=1 // pred_region
      %34 = dma.done [#allocation4], 256
    $region25: #{tpu_custom_call.1} parent=1 // pred_fallthru
      _
    %v35 = vld [vmem:[%s0] sm:$0xff]
    %v36 = vld [vmem:[%s0 + $0x8] sm:$0xff]
    %v37 = vld [vmem:[%s0 + $0x10] sm:$0xff]
    %v38 = vld [vmem:[%s0 + $0x18] sm:$0xff]
    %v39 = vld [vmem:[#allocation3] sm:$0xff]
    %v40 = vld [vmem:[#allocation3 + $0x8] sm:$0xff]
    %v41 = vld [vmem:[%s2] sm:$0xff]
    %v42 = vld [vmem:[%s2 + $0x8] sm:$0xff]
    %v43 = vld [vmem:[%s2 + $0x10] sm:$0xff]
    %v44 = vld [vmem:[%s2 + $0x18] sm:$0xff]
    %v45 = vld [vmem:[%s2 + $0x20] sm:$0xff]
    %v46 = vld [vmem:[%s2 + $0x28] sm:$0xff]
    %v47 = vld [vmem:[%s2 + $0x30] sm:$0xff]
    %v48 = vld [vmem:[%s2 + $0x38] sm:$0xff]
    %v49 = vld [vmem:[%s4] sm:$0xf]
    %v50 = vlaneseq
    %v51 = vshrl.u32 %v50, 7
    %v52 = vsub.s32 0, %v51
    %v53 = vrot.slane %v49, %v52
    %vm54 = vcmask 261120
    %v56 = vsel %vm54, %v39, 0
    %v59 = vsel %vm54, %v40, 0
    %61 = vmatprep.subr.mxu0 0.0
    %62 = vmatpush1.msra.mxu0 %v41
    %63 = vmatprep.subr.mxu0 0.0
    %64 = vmatpush1.msra.mxu0 %v43
    %65 = vmatprep.subr.mxu0 0.0
    %66 = vmatpush1.msra.mxu0 %v45
    %67 = vmatprep.subr.mxu0 0.0
    %68 = vmatpush1.msra.mxu0 %v47
    %69 = vmatprep.subr.mxu0 0.0
    %70 = vmatpush1.msra.mxu0 0.0
    %71 = vmatprep.subr.mxu0 0.0
    %72 = vmatpush1.msra.mxu0 0.0
    %73 = vmatprep.subr.mxu0 0.0
    %74 = vmatpush1.msra.mxu0 0.0
    %75 = vmatprep.subr.mxu0 0.0
    %76 = vmatpush1.msra.mxu0 0.0
    %77 = vmatprep.subr.mxu0 0.0
    %78 = vmatpush1.msra.mxu0 0.0
    %79 = vmatprep.subr.mxu0 0.0
    %80 = vmatpush1.msra.mxu0 0.0
    %81 = vmatprep.subr.mxu0 0.0
    %82 = vmatpush1.msra.mxu0 0.0
    %83 = vmatprep.subr.mxu0 0.0
    %84 = vmatpush1.msra.mxu0 0.0
    %85 = vmatprep.subr.mxu0 0.0
    %86 = vmatpush1.msra.mxu0 0.0
    %87 = vmatprep.subr.mxu0 0.0
    %88 = vmatpush1.msra.mxu0 0.0
    %89 = vmatprep.subr.mxu0 0.0
    %90 = vmatpush1.msra.mxu0 0.0
    %91 = vmatprep.subr.mxu0 0.0
    %92 = vmatpush1.msra.mxu0 0.0
    %93 = vmatprep.subr.mxu0 0.0
    %94 = vmatpush1.msra.mxu0 0.0
    %95 = vmatprep.subr.mxu0 0.0
    %96 = vmatpush1.msra.mxu0 0.0
    %97 = vmatprep.subr.mxu0 0.0
    %98 = vmatpush1.msra.mxu0 0.0
    %99 = vmatprep.subr.mxu0 0.0
    %100 = vmatpush1.msra.mxu0 0.0
    %101 = vmatprep.subr.mxu0 0.0
    %102 = vmatpush1.msra.mxu0 0.0
    %103 = vmatprep.subr.mxu0 0.0
    %104 = vmatpush1.msra.mxu0 0.0
    %105 = vmatprep.subr.mxu0 0.0
    %106 = vmatpush1.msra.mxu0 0.0
    %107 = vmatprep.subr.mxu0 0.0
    %108 = vmatpush1.msra.mxu0 0.0
    %109 = vmatprep.subr.mxu0 0.0
    %110 = vmatpush1.msra.mxu0 0.0
    %111 = vmatprep.subr.mxu0 0.0
    %112 = vmatpush1.msra.mxu0 0.0
    %113 = vmatprep.subr.mxu0 0.0
    %114 = vmatpush1.msra.mxu0 0.0
    %115 = vmatprep.subr.mxu0 0.0
    %116 = vmatpush1.msra.mxu0 0.0
    %117 = vmatprep.subr.mxu0 0.0
    %118 = vmatpush1.msra.mxu0 0.0
    %119 = vmatprep.subr.mxu0 0.0
    %120 = vmatpush1.msra.mxu0 0.0
    %121 = vmatprep.subr.mxu0 0.0
    %122 = vmatpush1.msra.mxu0 0.0
    %123 = vmatprep.subr.mxu0 0.0
    %124 = vmatpush1.msra.mxu0 0.0
    %125 = vmatprep.mubr.f32.mxu0 0.0
    %126 = vmatmul.mubr.f32.gmra.mrb[0].mxu0 %v56
    %v127 = vpop.f32.mrb[0].mxu0
    %v128 = vadd.f32 %v53, %v127
    %v129 = vpop.f32.mrb[0].mxu0
    %130 = vmatprep.mubr.f32.mxu0 0.0
    %131 = vmatmul.mubr.f32.gmra.mrb[0].mxu0 %v59
    %v132 = vpop.f32.mrb[0].mxu0
    %v133 = vadd.f32 %v53, %v132
    %v134 = vpop.f32.mrb[0].mxu0
    %135 = vdwg.mxu0
    %140 = vrot.lane.b32.xlu0 %v41, 96
    %v141 = vpop.permute.xlu0 %140
    %142 = vrot.lane.b32.xlu0 %v43, 96
    %v143 = vpop.permute.xlu0 %142
    %144 = vrot.lane.b32.xlu0 %v45, 96
    %v145 = vpop.permute.xlu0 %144
    %146 = vrot.lane.b32.xlu0 %v47, 96
    %v147 = vpop.permute.xlu0 %146
    %153 = vrot.lane.b32.xlu0 %v53, 96
    %v154 = vpop.permute.xlu0 %153
    %v157 = vsel %vm54, %v35, 0
    %v160 = vsel %vm54, %v36, 0
    %v163 = vsel %vm54, %v37, 0
    %v166 = vsel %vm54, %v38, 0
    %168 = vmatprep.subr.mxu0 0.0
    %169 = vmatpush1.msra.mxu0 %v141
    %170 = vmatprep.subr.mxu0 0.0
    %171 = vmatpush1.msra.mxu0 %v143
    %172 = vmatprep.subr.mxu0 0.0
    %173 = vmatpush1.msra.mxu0 %v145
    %174 = vmatprep.subr.mxu0 0.0
    %175 = vmatpush1.msra.mxu0 %v147
    %176 = vmatprep.subr.mxu0 0.0
    %177 = vmatpush1.msra.mxu0 0.0
    %178 = vmatprep.subr.mxu0 0.0
    %179 = vmatpush1.msra.mxu0 0.0
    %180 = vmatprep.subr.mxu0 0.0
    %181 = vmatpush1.msra.mxu0 0.0
    %182 = vmatprep.subr.mxu0 0.0
    %183 = vmatpush1.msra.mxu0 0.0
    %184 = vmatprep.subr.mxu0 0.0
    %185 = vmatpush1.msra.mxu0 0.0
    %186 = vmatprep.subr.mxu0 0.0
    %187 = vmatpush1.msra.mxu0 0.0
    %188 = vmatprep.subr.mxu0 0.0
    %189 = vmatpush1.msra.mxu0 0.0
    %190 = vmatprep.subr.mxu0 0.0
    %191 = vmatpush1.msra.mxu0 0.0
    %192 = vmatprep.subr.mxu0 0.0
    %193 = vmatpush1.msra.mxu0 0.0
    %194 = vmatprep.subr.mxu0 0.0
    %195 = vmatpush1.msra.mxu0 0.0
    %196 = vmatprep.subr.mxu0 0.0
    %197 = vmatpush1.msra.mxu0 0.0
    %198 = vmatprep.subr.mxu0 0.0
    %199 = vmatpush1.msra.mxu0 0.0
    %200 = vmatprep.subr.mxu0 0.0
    %201 = vmatpush1.msra.mxu0 0.0
    %202 = vmatprep.subr.mxu0 0.0
    %203 = vmatpush1.msra.mxu0 0.0
    %204 = vmatprep.subr.mxu0 0.0
    %205 = vmatpush1.msra.mxu0 0.0
    %206 = vmatprep.subr.mxu0 0.0
    %207 = vmatpush1.msra.mxu0 0.0
    %208 = vmatprep.subr.mxu0 0.0
    %209 = vmatpush1.msra.mxu0 0.0
    %210 = vmatprep.subr.mxu0 0.0
    %211 = vmatpush1.msra.mxu0 0.0
    %212 = vmatprep.subr.mxu0 0.0
    %213 = vmatpush1.msra.mxu0 0.0
    %214 = vmatprep.subr.mxu0 0.0
    %215 = vmatpush1.msra.mxu0 0.0
    %216 = vmatprep.subr.mxu0 0.0
    %217 = vmatpush1.msra.mxu0 0.0
    %218 = vmatprep.subr.mxu0 0.0
    %219 = vmatpush1.msra.mxu0 0.0
    %220 = vmatprep.subr.mxu0 0.0
    %221 = vmatpush1.msra.mxu0 0.0
    %222 = vmatprep.subr.mxu0 0.0
    %223 = vmatpush1.msra.mxu0 0.0
    %224 = vmatprep.subr.mxu0 0.0
    %225 = vmatpush1.msra.mxu0 0.0
    %226 = vmatprep.subr.mxu0 0.0
    %227 = vmatpush1.msra.mxu0 0.0
    %228 = vmatprep.subr.mxu0 0.0
    %229 = vmatpush1.msra.mxu0 0.0
    %230 = vmatprep.subr.mxu0 0.0
    %231 = vmatpush1.msra.mxu0 0.0
    %232 = vmatprep.mubr.f32.mxu0 0.0
    %233 = vmatmul.mubr.f32.gmra.mrb[0].mxu0 %v157
    %v234 = vpop.f32.mrb[0].mxu0
    %v235 = vadd.f32 %v154, %v234
    %v236 = vpop.f32.mrb[0].mxu0
    %237 = vmatprep.mubr.f32.mxu0 0.0
    %238 = vmatmul.mubr.f32.gmra.mrb[0].mxu0 %v160
    %v239 = vpop.f32.mrb[0].mxu0
    %v240 = vadd.f32 %v154, %v239
    %v241 = vpop.f32.mrb[0].mxu0
    %242 = vmatprep.mubr.f32.mxu0 0.0
    %243 = vmatmul.mubr.f32.gmra.mrb[0].mxu0 %v163
    %v244 = vpop.f32.mrb[0].mxu0
    %v245 = vadd.f32 %v154, %v244
    %v246 = vpop.f32.mrb[0].mxu0
    %247 = vmatprep.mubr.f32.mxu0 0.0
    %248 = vmatmul.mubr.f32.gmra.mrb[0].mxu0 %v166
    %v249 = vpop.f32.mrb[0].mxu0
    %v250 = vadd.f32 %v154, %v249
    %v251 = vpop.f32.mrb[0].mxu0
    %252 = vdwg.mxu0
    %254 = vrot.lane.b32.xlu0 %v128, 96
    %v255 = vpop.permute.xlu0 %254
    %vm256 = vcmask 64512
    %v257 = vsel %vm256, %v128, 0
    %v260 = vsel %vm256, %v235, 0
    %v263 = vsel %vm256, %v240, 0
    %v265 = vsel %vm256, %v255, 0
    %267 = vmatprep.subr.mxu0 0.0
    %268 = vmatpush1.xpose.msra.mxu0 %v260
    %269 = vmatprep.subr.mxu0 0.0
    %270 = vmatpush1.xpose.msra.mxu0 %v263
    %271 = vmatprep.subr.mxu0 0.0
    %272 = vmatpush1.xpose.msra.mxu0 %v265
    %273 = vmatprep.subr.mxu0 0.0
    %274 = vmatpush1.xpose.msra.mxu0 0.0
    %275 = vmatprep.subr.mxu0 0.0
    %276 = vmatpush1.xpose.msra.mxu0 0.0
    %277 = vmatprep.subr.mxu0 0.0
    %278 = vmatpush1.xpose.msra.mxu0 0.0
    %279 = vmatprep.subr.mxu0 0.0
    %280 = vmatpush1.xpose.msra.mxu0 0.0
    %281 = vmatprep.subr.mxu0 0.0
    %282 = vmatpush1.xpose.msra.mxu0 0.0
    %283 = vmatprep.subr.mxu0 0.0
    %284 = vmatpush1.xpose.msra.mxu0 0.0
    %285 = vmatprep.subr.mxu0 0.0
    %286 = vmatpush1.xpose.msra.mxu0 0.0
    %287 = vmatprep.subr.mxu0 0.0
    %288 = vmatpush1.xpose.msra.mxu0 0.0
    %289 = vmatprep.subr.mxu0 0.0
    %290 = vmatpush1.xpose.msra.mxu0 0.0
    %291 = vmatprep.subr.mxu0 0.0
    %292 = vmatpush1.xpose.msra.mxu0 0.0
    %293 = vmatprep.subr.mxu0 0.0
    %294 = vmatpush1.xpose.msra.mxu0 0.0
    %295 = vmatprep.subr.mxu0 0.0
    %296 = vmatpush1.xpose.msra.mxu0 0.0
    %297 = vmatprep.subr.mxu0 0.0
    %298 = vmatpush1.xpose.msra.mxu0 0.0
    %299 = vmatprep.subr.mxu0 0.0
    %300 = vmatpush1.xpose.msra.mxu0 0.0
    %301 = vmatprep.subr.mxu0 0.0
    %302 = vmatpush1.xpose.msra.mxu0 0.0
    %303 = vmatprep.subr.mxu0 0.0
    %304 = vmatpush1.xpose.msra.mxu0 0.0
    %305 = vmatprep.subr.mxu0 0.0
    %306 = vmatpush1.xpose.msra.mxu0 0.0
    %307 = vmatprep.subr.mxu0 0.0
    %308 = vmatpush1.xpose.msra.mxu0 0.0
    %309 = vmatprep.subr.mxu0 0.0
    %310 = vmatpush1.xpose.msra.mxu0 0.0
    %311 = vmatprep.subr.mxu0 0.0
    %312 = vmatpush1.xpose.msra.mxu0 0.0
    %313 = vmatprep.subr.mxu0 0.0
    %314 = vmatpush1.xpose.msra.mxu0 0.0
    %315 = vmatprep.subr.mxu0 0.0
    %316 = vmatpush1.xpose.msra.mxu0 0.0
    %317 = vmatprep.subr.mxu0 0.0
    %318 = vmatpush1.xpose.msra.mxu0 0.0
    %319 = vmatprep.subr.mxu0 0.0
    %320 = vmatpush1.xpose.msra.mxu0 0.0
    %321 = vmatprep.subr.mxu0 0.0
    %322 = vmatpush1.xpose.msra.mxu0 0.0
    %323 = vmatprep.subr.mxu0 0.0
    %324 = vmatpush1.xpose.msra.mxu0 0.0
    %325 = vmatprep.subr.mxu0 0.0
    %326 = vmatpush1.xpose.msra.mxu0 0.0
    %327 = vmatprep.subr.mxu0 0.0
    %328 = vmatpush1.xpose.msra.mxu0 0.0
    %329 = vmatprep.subr.mxu0 0.0
    %330 = vmatpush1.xpose.msra.mxu0 0.0
    %331 = vmatprep.mubr.f32.mxu0 0.0
    %332 = vmatmul.mubr.f32.gmra.mrb[0].mxu0 %v257
    %v333 = vpop.f32.mrb[0].mxu0
    %v334 = vadd.f32 0.0, %v333
    %v335 = vpop.f32.mrb[0].mxu0
    %336 = vdwg.mxu0
    %v337 = vmul.f32 %v334, 0.35355338
    %vm338 = vcmask 195584
    %v339 = vsel %vm338, %v337, -inf
    %340 = vmax.xlane.f32.xlu0 %v339
    %v341 = vpop.xlane.xlu0 %340
    %v342 = vsub.f32 %v337, %v341
    %v343 = vmul.f32 %v342, 1.442695
    %v344 = vpow.pop %v343
    %v345 = vsel %vm338, %v344, 0.0
    %346 = vadd.xlane.f32.xlu0 %v345
    %v347 = vpop.xlane.xlu0 %346
    %v348 = vrcp.pop %v347
    %v349 = vmul.f32 %v344, %v348
    %350 = vrot.lane.b32.xlu0 %v235, 96
    %v351 = vpop.permute.xlu0 %350
    %352 = vrot.lane.b32.xlu0 %v240, 96
    %v353 = vpop.permute.xlu0 %352
    %354 = vrot.lane.b32.xlu0 %v255, 96
    %v355 = vpop.permute.xlu0 %354
    %v360 = vsel %vm338, %v349, 0
    %362 = vmatprep.subr.mxu0 0.0
    %363 = vmatpush1.msra.mxu0 %v351
    %364 = vmatprep.subr.mxu0 0.0
    %365 = vmatpush1.msra.mxu0 %v353
    %366 = vmatprep.subr.mxu0 0.0
    %367 = vmatpush1.msra.mxu0 %v355
    %368 = vmatprep.subr.mxu0 0.0
    %369 = vmatpush1.msra.mxu0 0.0
    %370 = vmatprep.subr.mxu0 0.0
    %371 = vmatpush1.msra.mxu0 0.0
    %372 = vmatprep.subr.mxu0 0.0
    %373 = vmatpush1.msra.mxu0 0.0
    %374 = vmatprep.subr.mxu0 0.0
    %375 = vmatpush1.msra.mxu0 0.0
    %376 = vmatprep.subr.mxu0 0.0
    %377 = vmatpush1.msra.mxu0 0.0
    %378 = vmatprep.subr.mxu0 0.0
    %379 = vmatpush1.msra.mxu0 0.0
    %380 = vmatprep.subr.mxu0 0.0
    %381 = vmatpush1.msra.mxu0 0.0
    %382 = vmatprep.subr.mxu0 0.0
    %383 = vmatpush1.msra.mxu0 0.0
    %384 = vmatprep.subr.mxu0 0.0
    %385 = vmatpush1.msra.mxu0 0.0
    %386 = vmatprep.subr.mxu0 0.0
    %387 = vmatpush1.msra.mxu0 0.0
    %388 = vmatprep.subr.mxu0 0.0
    %389 = vmatpush1.msra.mxu0 0.0
    %390 = vmatprep.subr.mxu0 0.0
    %391 = vmatpush1.msra.mxu0 0.0
    %392 = vmatprep.subr.mxu0 0.0
    %393 = vmatpush1.msra.mxu0 0.0
    %394 = vmatprep.subr.mxu0 0.0
    %395 = vmatpush1.msra.mxu0 0.0
    %396 = vmatprep.subr.mxu0 0.0
    %397 = vmatpush1.msra.mxu0 0.0
    %398 = vmatprep.subr.mxu0 0.0
    %399 = vmatpush1.msra.mxu0 0.0
    %400 = vmatprep.subr.mxu0 0.0
    %401 = vmatpush1.msra.mxu0 0.0
    %402 = vmatprep.subr.mxu0 0.0
    %403 = vmatpush1.msra.mxu0 0.0
    %404 = vmatprep.subr.mxu0 0.0
    %405 = vmatpush1.msra.mxu0 0.0
    %406 = vmatprep.subr.mxu0 0.0
    %407 = vmatpush1.msra.mxu0 0.0
    %408 = vmatprep.subr.mxu0 0.0
    %409 = vmatpush1.msra.mxu0 0.0
    %410 = vmatprep.subr.mxu0 0.0
    %411 = vmatpush1.msra.mxu0 0.0
    %412 = vmatprep.subr.mxu0 0.0
    %413 = vmatpush1.msra.mxu0 0.0
    %414 = vmatprep.subr.mxu0 0.0
    %415 = vmatpush1.msra.mxu0 0.0
    %416 = vmatprep.subr.mxu0 0.0
    %417 = vmatpush1.msra.mxu0 0.0
    %418 = vmatprep.subr.mxu0 0.0
    %419 = vmatpush1.msra.mxu0 0.0
    %420 = vmatprep.subr.mxu0 0.0
    %421 = vmatpush1.msra.mxu0 0.0
    %422 = vmatprep.subr.mxu0 0.0
    %423 = vmatpush1.msra.mxu0 0.0
    %424 = vmatprep.subr.mxu0 0.0
    %425 = vmatpush1.msra.mxu0 0.0
    %426 = vmatprep.mubr.f32.mxu0 0.0
    %427 = vmatmul.mubr.f32.gmra.mrb[0].mxu0 %v360
    %v428 = vpop.f32.mrb[0].mxu0
    %v429 = vadd.f32 0.0, %v428
    %v430 = vpop.f32.mrb[0].mxu0
    %431 = vdwg.mxu0
    %432 = vst.msk [vmem:[#allocation2] sm:$0xff] %vm256, %v429
    %433 = vrot.lane.b32.xlu0 %v128, 120
    %v434 = vpop.permute.xlu0 %433
    %435 = vrot.lane.b32.xlu0 %v235, 120
    %v436 = vpop.permute.xlu0 %435
    %437 = vrot.lane.b32.xlu0 %v240, 120
    %v438 = vpop.permute.xlu0 %437
    %439 = vrot.lane.b32.xlu0 %v255, 120
    %v440 = vpop.permute.xlu0 %439
    %v441 = vsel %vm256, %v434, 0
    %v443 = vsel %vm256, %v436, 0
    %v445 = vsel %vm256, %v438, 0
    %v447 = vsel %vm256, %v440, 0
    %449 = vmatprep.subr.mxu0 0.0
    %450 = vmatpush1.xpose.msra.mxu0 %v443
    %451 = vmatprep.subr.mxu0 0.0
    %452 = vmatpush1.xpose.msra.mxu0 %v445
    %453 = vmatprep.subr.mxu0 0.0
    %454 = vmatpush1.xpose.msra.mxu0 %v447
    %455 = vmatprep.subr.mxu0 0.0
    %456 = vmatpush1.xpose.msra.mxu0 0.0
    %457 = vmatprep.subr.mxu0 0.0
    %458 = vmatpush1.xpose.msra.mxu0 0.0
    %459 = vmatprep.subr.mxu0 0.0
    %460 = vmatpush1.xpose.msra.mxu0 0.0
    %461 = vmatprep.subr.mxu0 0.0
    %462 = vmatpush1.xpose.msra.mxu0 0.0
    %463 = vmatprep.subr.mxu0 0.0
    %464 = vmatpush1.xpose.msra.mxu0 0.0
    %465 = vmatprep.subr.mxu0 0.0
    %466 = vmatpush1.xpose.msra.mxu0 0.0
    %467 = vmatprep.subr.mxu0 0.0
    %468 = vmatpush1.xpose.msra.mxu0 0.0
    %469 = vmatprep.subr.mxu0 0.0
    %470 = vmatpush1.xpose.msra.mxu0 0.0
    %471 = vmatprep.subr.mxu0 0.0
    %472 = vmatpush1.xpose.msra.mxu0 0.0
    %473 = vmatprep.subr.mxu0 0.0
    %474 = vmatpush1.xpose.msra.mxu0 0.0
    %475 = vmatprep.subr.mxu0 0.0
    %476 = vmatpush1.xpose.msra.mxu0 0.0
    %477 = vmatprep.subr.mxu0 0.0
    %478 = vmatpush1.xpose.msra.mxu0 0.0
    %479 = vmatprep.subr.mxu0 0.0
    %480 = vmatpush1.xpose.msra.mxu0 0.0
    %481 = vmatprep.subr.mxu0 0.0
    %482 = vmatpush1.xpose.msra.mxu0 0.0
    %483 = vmatprep.subr.mxu0 0.0
    %484 = vmatpush1.xpose.msra.mxu0 0.0
    %485 = vmatprep.subr.mxu0 0.0
    %486 = vmatpush1.xpose.msra.mxu0 0.0
    %487 = vmatprep.subr.mxu0 0.0
    %488 = vmatpush1.xpose.msra.mxu0 0.0
    %489 = vmatprep.subr.mxu0 0.0
    %490 = vmatpush1.xpose.msra.mxu0 0.0
    %491 = vmatprep.subr.mxu0 0.0
    %492 = vmatpush1.xpose.msra.mxu0 0.0
    %493 = vmatprep.subr.mxu0 0.0
    %494 = vmatpush1.xpose.msra.mxu0 0.0
    %495 = vmatprep.subr.mxu0 0.0
    %496 = vmatpush1.xpose.msra.mxu0 0.0
    %497 = vmatprep.subr.mxu0 0.0
    %498 = vmatpush1.xpose.msra.mxu0 0.0
    %499 = vmatprep.subr.mxu0 0.0
    %500 = vmatpush1.xpose.msra.mxu0 0.0
    %501 = vmatprep.subr.mxu0 0.0
    %502 = vmatpush1.xpose.msra.mxu0 0.0
    %503 = vmatprep.subr.mxu0 0.0
    %504 = vmatpush1.xpose.msra.mxu0 0.0
    %505 = vmatprep.subr.mxu0 0.0
    %506 = vmatpush1.xpose.msra.mxu0 0.0
    %507 = vmatprep.subr.mxu0 0.0
    %508 = vmatpush1.xpose.msra.mxu0 0.0
    %509 = vmatprep.subr.mxu0 0.0
    %510 = vmatpush1.xpose.msra.mxu0 0.0
    %511 = vmatprep.subr.mxu0 0.0
    %512 = vmatpush1.xpose.msra.mxu0 0.0
    %513 = vmatprep.mubr.f32.mxu0 0.0
    %514 = vmatmul.mubr.f32.gmra.mrb[0].mxu0 %v441
    %v515 = vpop.f32.mrb[0].mxu0
    %v516 = vadd.f32 0.0, %v515
    %v517 = vpop.f32.mrb[0].mxu0
    %518 = vdwg.mxu0
    %v519 = vmul.f32 %v516, 0.35355338
    %v520 = vsel %vm338, %v519, -inf
    %521 = vmax.xlane.f32.xlu0 %v520
    %v522 = vpop.xlane.xlu0 %521
    %v523 = vsub.f32 %v519, %v522
    %v524 = vmul.f32 %v523, 1.442695
    %v525 = vpow.pop %v524
    %v526 = vsel %vm338, %v525, 0.0
    %527 = vadd.xlane.f32.xlu0 %v526
    %v528 = vpop.xlane.xlu0 %527
    %v529 = vrcp.pop %v528
    %v530 = vmul.f32 %v525, %v529
    %531 = vrot.lane.b32.xlu0 %v235, 88
    %v532 = vpop.permute.xlu0 %531
    %533 = vrot.lane.b32.xlu0 %v240, 88
    %v534 = vpop.permute.xlu0 %533
    %535 = vrot.lane.b32.xlu0 %v255, 88
    %v536 = vpop.permute.xlu0 %535
    %v541 = vsel %vm338, %v530, 0
    %543 = vmatprep.subr.mxu0 0.0
    %544 = vmatpush1.msra.mxu0 %v532
    %545 = vmatprep.subr.mxu0 0.0
    %546 = vmatpush1.msra.mxu0 %v534
    %547 = vmatprep.subr.mxu0 0.0
    %548 = vmatpush1.msra.mxu0 %v536
    %549 = vmatprep.subr.mxu0 0.0
    %550 = vmatpush1.msra.mxu0 0.0
    %551 = vmatprep.subr.mxu0 0.0
    %552 = vmatpush1.msra.mxu0 0.0
    %553 = vmatprep.subr.mxu0 0.0
    %554 = vmatpush1.msra.mxu0 0.0
    %555 = vmatprep.subr.mxu0 0.0
    %556 = vmatpush1.msra.mxu0 0.0
    %557 = vmatprep.subr.mxu0 0.0
    %558 = vmatpush1.msra.mxu0 0.0
    %559 = vmatprep.subr.mxu0 0.0
    %560 = vmatpush1.msra.mxu0 0.0
    %561 = vmatprep.subr.mxu0 0.0
    %562 = vmatpush1.msra.mxu0 0.0
    %563 = vmatprep.subr.mxu0 0.0
    %564 = vmatpush1.msra.mxu0 0.0
    %565 = vmatprep.subr.mxu0 0.0
    %566 = vmatpush1.msra.mxu0 0.0
    %567 = vmatprep.subr.mxu0 0.0
    %568 = vmatpush1.msra.mxu0 0.0
    %569 = vmatprep.subr.mxu0 0.0
    %570 = vmatpush1.msra.mxu0 0.0
    %571 = vmatprep.subr.mxu0 0.0
    %572 = vmatpush1.msra.mxu0 0.0
    %573 = vmatprep.subr.mxu0 0.0
    %574 = vmatpush1.msra.mxu0 0.0
    %575 = vmatprep.subr.mxu0 0.0
    %576 = vmatpush1.msra.mxu0 0.0
    %577 = vmatprep.subr.mxu0 0.0
    %578 = vmatpush1.msra.mxu0 0.0
    %579 = vmatprep.subr.mxu0 0.0
    %580 = vmatpush1.msra.mxu0 0.0
    %581 = vmatprep.subr.mxu0 0.0
    %582 = vmatpush1.msra.mxu0 0.0
    %583 = vmatprep.subr.mxu0 0.0
    %584 = vmatpush1.msra.mxu0 0.0
    %585 = vmatprep.subr.mxu0 0.0
    %586 = vmatpush1.msra.mxu0 0.0
    %587 = vmatprep.subr.mxu0 0.0
    %588 = vmatpush1.msra.mxu0 0.0
    %589 = vmatprep.subr.mxu0 0.0
    %590 = vmatpush1.msra.mxu0 0.0
    %591 = vmatprep.subr.mxu0 0.0
    %592 = vmatpush1.msra.mxu0 0.0
    %593 = vmatprep.subr.mxu0 0.0
    %594 = vmatpush1.msra.mxu0 0.0
    %595 = vmatprep.subr.mxu0 0.0
    %596 = vmatpush1.msra.mxu0 0.0
    %597 = vmatprep.subr.mxu0 0.0
    %598 = vmatpush1.msra.mxu0 0.0
    %599 = vmatprep.subr.mxu0 0.0
    %600 = vmatpush1.msra.mxu0 0.0
    %601 = vmatprep.subr.mxu0 0.0
    %602 = vmatpush1.msra.mxu0 0.0
    %603 = vmatprep.subr.mxu0 0.0
    %604 = vmatpush1.msra.mxu0 0.0
    %605 = vmatprep.subr.mxu0 0.0
    %606 = vmatpush1.msra.mxu0 0.0
    %607 = vmatprep.mubr.f32.mxu0 0.0
    %608 = vmatmul.mubr.f32.gmra.mrb[0].mxu0 %v541
    %v609 = vpop.f32.mrb[0].mxu0
    %v610 = vadd.f32 0.0, %v609
    %v611 = vpop.f32.mrb[0].mxu0
    %612 = vdwg.mxu0
    %614 = vrot.lane.b32.xlu0 %v610, 8
    %v615 = vpop.permute.xlu0 %614
    %vm617 = vcmask 130112
    %618 = vst.msk [vmem:[#allocation2] sm:$0xff] %vm617, %v615
    %619 = vrot.lane.b32.xlu0 %v128, 112
    %v620 = vpop.permute.xlu0 %619
    %621 = vrot.lane.b32.xlu0 %v235, 112
    %v622 = vpop.permute.xlu0 %621
    %623 = vrot.lane.b32.xlu0 %v240, 112
    %v624 = vpop.permute.xlu0 %623
    %625 = vrot.lane.b32.xlu0 %v255, 112
    %v626 = vpop.permute.xlu0 %625
    %v627 = vsel %vm256, %v620, 0
    %v629 = vsel %vm256, %v622, 0
    %v631 = vsel %vm256, %v624, 0
    %v633 = vsel %vm256, %v626, 0
    %635 = vmatprep.subr.mxu0 0.0
    %636 = vmatpush1.xpose.msra.mxu0 %v629
    %637 = vmatprep.subr.mxu0 0.0
    %638 = vmatpush1.xpose.msra.mxu0 %v631
    %639 = vmatprep.subr.mxu0 0.0
    %640 = vmatpush1.xpose.msra.mxu0 %v633
    %641 = vmatprep.subr.mxu0 0.0
    %642 = vmatpush1.xpose.msra.mxu0 0.0
    %643 = vmatprep.subr.mxu0 0.0
    %644 = vmatpush1.xpose.msra.mxu0 0.0
    %645 = vmatprep.subr.mxu0 0.0
    %646 = vmatpush1.xpose.msra.mxu0 0.0
    %647 = vmatprep.subr.mxu0 0.0
    %648 = vmatpush1.xpose.msra.mxu0 0.0
    %649 = vmatprep.subr.mxu0 0.0
    %650 = vmatpush1.xpose.msra.mxu0 0.0
    %651 = vmatprep.subr.mxu0 0.0
    %652 = vmatpush1.xpose.msra.mxu0 0.0
    %653 = vmatprep.subr.mxu0 0.0
    %654 = vmatpush1.xpose.msra.mxu0 0.0
    %655 = vmatprep.subr.mxu0 0.0
    %656 = vmatpush1.xpose.msra.mxu0 0.0
    %657 = vmatprep.subr.mxu0 0.0
    %658 = vmatpush1.xpose.msra.mxu0 0.0
    %659 = vmatprep.subr.mxu0 0.0
    %660 = vmatpush1.xpose.msra.mxu0 0.0
    %661 = vmatprep.subr.mxu0 0.0
    %662 = vmatpush1.xpose.msra.mxu0 0.0
    %663 = vmatprep.subr.mxu0 0.0
    %664 = vmatpush1.xpose.msra.mxu0 0.0
    %665 = vmatprep.subr.mxu0 0.0
    %666 = vmatpush1.xpose.msra.mxu0 0.0
    %667 = vmatprep.subr.mxu0 0.0
    %668 = vmatpush1.xpose.msra.mxu0 0.0
    %669 = vmatprep.subr.mxu0 0.0
    %670 = vmatpush1.xpose.msra.mxu0 0.0
    %671 = vmatprep.subr.mxu0 0.0
    %672 = vmatpush1.xpose.msra.mxu0 0.0
    %673 = vmatprep.subr.mxu0 0.0
    %674 = vmatpush1.xpose.msra.mxu0 0.0
    %675 = vmatprep.subr.mxu0 0.0
    %676 = vmatpush1.xpose.msra.mxu0 0.0
    %677 = vmatprep.subr.mxu0 0.0
    %678 = vmatpush1.xpose.msra.mxu0 0.0
    %679 = vmatprep.subr.mxu0 0.0
    %680 = vmatpush1.xpose.msra.mxu0 0.0
    %681 = vmatprep.subr.mxu0 0.0
    %682 = vmatpush1.xpose.msra.mxu0 0.0
    %683 = vmatprep.subr.mxu0 0.0
    %684 = vmatpush1.xpose.msra.mxu0 0.0
    %685 = vmatprep.subr.mxu0 0.0
    %686 = vmatpush1.xpose.msra.mxu0 0.0
    %687 = vmatprep.subr.mxu0 0.0
    %688 = vmatpush1.xpose.msra.mxu0 0.0
    %689 = vmatprep.subr.mxu0 0.0
    %690 = vmatpush1.xpose.msra.mxu0 0.0
    %691 = vmatprep.subr.mxu0 0.0
    %692 = vmatpush1.xpose.msra.mxu0 0.0
    %693 = vmatprep.subr.mxu0 0.0
    %694 = vmatpush1.xpose.msra.mxu0 0.0
    %695 = vmatprep.subr.mxu0 0.0
    %696 = vmatpush1.xpose.msra.mxu0 0.0
    %697 = vmatprep.subr.mxu0 0.0
    %698 = vmatpush1.xpose.msra.mxu0 0.0
    %699 = vmatprep.mubr.f32.mxu0 0.0
    %700 = vmatmul.mubr.f32.gmra.mrb[0].mxu0 %v627
    %v701 = vpop.f32.mrb[0].mxu0
    %v702 = vadd.f32 0.0, %v701
    %v703 = vpop.f32.mrb[0].mxu0
    %704 = vdwg.mxu0
    %v705 = vmul.f32 %v702, 0.35355338
    %v706 = vsel %vm338, %v705, -inf
    %707 = vmax.xlane.f32.xlu0 %v706
    %v708 = vpop.xlane.xlu0 %707
    %v709 = vsub.f32 %v705, %v708
    %v710 = vmul.f32 %v709, 1.442695
    %v711 = vpow.pop %v710
    %v712 = vsel %vm338, %v711, 0.0
    %713 = vadd.xlane.f32.xlu0 %v712
    %v714 = vpop.xlane.xlu0 %713
    %v715 = vrcp.pop %v714
    %v716 = vmul.f32 %v711, %v715
    %717 = vrot.lane.b32.xlu0 %v235, 80
    %v718 = vpop.permute.xlu0 %717
    %719 = vrot.lane.b32.xlu0 %v240, 80
    %v720 = vpop.permute.xlu0 %719
    %721 = vrot.lane.b32.xlu0 %v255, 80
    %v722 = vpop.permute.xlu0 %721
    %v727 = vsel %vm338, %v716, 0
    %729 = vmatprep.subr.mxu0 0.0
    %730 = vmatpush1.msra.mxu0 %v718
    %731 = vmatprep.subr.mxu0 0.0
    %732 = vmatpush1.msra.mxu0 %v720
    %733 = vmatprep.subr.mxu0 0.0
    %734 = vmatpush1.msra.mxu0 %v722
    %735 = vmatprep.subr.mxu0 0.0
    %736 = vmatpush1.msra.mxu0 0.0
    %737 = vmatprep.subr.mxu0 0.0
    %738 = vmatpush1.msra.mxu0 0.0
    %739 = vmatprep.subr.mxu0 0.0
    %740 = vmatpush1.msra.mxu0 0.0
    %741 = vmatprep.subr.mxu0 0.0
    %742 = vmatpush1.msra.mxu0 0.0
    %743 = vmatprep.subr.mxu0 0.0
    %744 = vmatpush1.msra.mxu0 0.0
    %745 = vmatprep.subr.mxu0 0.0
    %746 = vmatpush1.msra.mxu0 0.0
    %747 = vmatprep.subr.mxu0 0.0
    %748 = vmatpush1.msra.mxu0 0.0
    %749 = vmatprep.subr.mxu0 0.0
    %750 = vmatpush1.msra.mxu0 0.0
    %751 = vmatprep.subr.mxu0 0.0
    %752 = vmatpush1.msra.mxu0 0.0
    %753 = vmatprep.subr.mxu0 0.0
    %754 = vmatpush1.msra.mxu0 0.0
    %755 = vmatprep.subr.mxu0 0.0
    %756 = vmatpush1.msra.mxu0 0.0
    %757 = vmatprep.subr.mxu0 0.0
    %758 = vmatpush1.msra.mxu0 0.0
    %759 = vmatprep.subr.mxu0 0.0
    %760 = vmatpush1.msra.mxu0 0.0
    %761 = vmatprep.subr.mxu0 0.0
    %762 = vmatpush1.msra.mxu0 0.0
    %763 = vmatprep.subr.mxu0 0.0
    %764 = vmatpush1.msra.mxu0 0.0
    %765 = vmatprep.subr.mxu0 0.0
    %766 = vmatpush1.msra.mxu0 0.0
    %767 = vmatprep.subr.mxu0 0.0
    %768 = vmatpush1.msra.mxu0 0.0
    %769 = vmatprep.subr.mxu0 0.0
    %770 = vmatpush1.msra.mxu0 0.0
    %771 = vmatprep.subr.mxu0 0.0
    %772 = vmatpush1.msra.mxu0 0.0
    %773 = vmatprep.subr.mxu0 0.0
    %774 = vmatpush1.msra.mxu0 0.0
    %775 = vmatprep.subr.mxu0 0.0
    %776 = vmatpush1.msra.mxu0 0.0
    %777 = vmatprep.subr.mxu0 0.0
    %778 = vmatpush1.msra.mxu0 0.0
    %779 = vmatprep.subr.mxu0 0.0
    %780 = vmatpush1.msra.mxu0 0.0
    %781 = vmatprep.subr.mxu0 0.0
    %782 = vmatpush1.msra.mxu0 0.0
    %783 = vmatprep.subr.mxu0 0.0
    %784 = vmatpush1.msra.mxu0 0.0
    %785 = vmatprep.subr.mxu0 0.0
    %786 = vmatpush1.msra.mxu0 0.0
    %787 = vmatprep.subr.mxu0 0.0
    %788 = vmatpush1.msra.mxu0 0.0
    %789 = vmatprep.subr.mxu0 0.0
    %790 = vmatpush1.msra.mxu0 0.0
    %791 = vmatprep.subr.mxu0 0.0
    %792 = vmatpush1.msra.mxu0 0.0
    %793 = vmatprep.mubr.f32.mxu0 0.0
    %794 = vmatmul.mubr.f32.gmra.mrb[0].mxu0 %v727
    %v795 = vpop.f32.mrb[0].mxu0
    %v796 = vadd.f32 0.0, %v795
    %v797 = vpop.f32.mrb[0].mxu0
    %798 = vdwg.mxu0
    %800 = vrot.lane.b32.xlu0 %v796, 16
    %v801 = vpop.permute.xlu0 %800
    %vm803 = vcmask 195712
    %804 = vst.msk [vmem:[#allocation2] sm:$0xff] %vm803, %v801
    %805 = vrot.lane.b32.xlu0 %v128, 104
    %v806 = vpop.permute.xlu0 %805
    %807 = vrot.lane.b32.xlu0 %v235, 104
    %v808 = vpop.permute.xlu0 %807
    %809 = vrot.lane.b32.xlu0 %v240, 104
    %v810 = vpop.permute.xlu0 %809
    %811 = vrot.lane.b32.xlu0 %v255, 104
    %v812 = vpop.permute.xlu0 %811
    %v813 = vsel %vm256, %v806, 0
    %v815 = vsel %vm256, %v808, 0
    %v817 = vsel %vm256, %v810, 0
    %v819 = vsel %vm256, %v812, 0
    %821 = vmatprep.subr.mxu0 0.0
    %822 = vmatpush1.xpose.msra.mxu0 %v815
    %823 = vmatprep.subr.mxu0 0.0
    %824 = vmatpush1.xpose.msra.mxu0 %v817
    %825 = vmatprep.subr.mxu0 0.0
    %826 = vmatpush1.xpose.msra.mxu0 %v819
    %827 = vmatprep.subr.mxu0 0.0
    %828 = vmatpush1.xpose.msra.mxu0 0.0
    %829 = vmatprep.subr.mxu0 0.0
    %830 = vmatpush1.xpose.msra.mxu0 0.0
    %831 = vmatprep.subr.mxu0 0.0
    %832 = vmatpush1.xpose.msra.mxu0 0.0
    %833 = vmatprep.subr.mxu0 0.0
    %834 = vmatpush1.xpose.msra.mxu0 0.0
    %835 = vmatprep.subr.mxu0 0.0
    %836 = vmatpush1.xpose.msra.mxu0 0.0
    %837 = vmatprep.subr.mxu0 0.0
    %838 = vmatpush1.xpose.msra.mxu0 0.0
    %839 = vmatprep.subr.mxu0 0.0
    %840 = vmatpush1.xpose.msra.mxu0 0.0
    %841 = vmatprep.subr.mxu0 0.0
    %842 = vmatpush1.xpose.msra.mxu0 0.0
    %843 = vmatprep.subr.mxu0 0.0
    %844 = vmatpush1.xpose.msra.mxu0 0.0
    %845 = vmatprep.subr.mxu0 0.0
    %846 = vmatpush1.xpose.msra.mxu0 0.0
    %847 = vmatprep.subr.mxu0 0.0
    %848 = vmatpush1.xpose.msra.mxu0 0.0
    %849 = vmatprep.subr.mxu0 0.0
    %850 = vmatpush1.xpose.msra.mxu0 0.0
    %851 = vmatprep.subr.mxu0 0.0
    %852 = vmatpush1.xpose.msra.mxu0 0.0
    %853 = vmatprep.subr.mxu0 0.0
    %854 = vmatpush1.xpose.msra.mxu0 0.0
    %855 = vmatprep.subr.mxu0 0.0
    %856 = vmatpush1.xpose.msra.mxu0 0.0
    %857 = vmatprep.subr.mxu0 0.0
    %858 = vmatpush1.xpose.msra.mxu0 0.0
    %859 = vmatprep.subr.mxu0 0.0
    %860 = vmatpush1.xpose.msra.mxu0 0.0
    %861 = vmatprep.subr.mxu0 0.0
    %862 = vmatpush1.xpose.msra.mxu0 0.0
    %863 = vmatprep.subr.mxu0 0.0
    %864 = vmatpush1.xpose.msra.mxu0 0.0
    %865 = vmatprep.subr.mxu0 0.0
    %866 = vmatpush1.xpose.msra.mxu0 0.0
    %867 = vmatprep.subr.mxu0 0.0
    %868 = vmatpush1.xpose.msra.mxu0 0.0
    %869 = vmatprep.subr.mxu0 0.0
    %870 = vmatpush1.xpose.msra.mxu0 0.0
    %871 = vmatprep.subr.mxu0 0.0
    %872 = vmatpush1.xpose.msra.mxu0 0.0
    %873 = vmatprep.subr.mxu0 0.0
    %874 = vmatpush1.xpose.msra.mxu0 0.0
    %875 = vmatprep.subr.mxu0 0.0
    %876 = vmatpush1.xpose.msra.mxu0 0.0
    %877 = vmatprep.subr.mxu0 0.0
    %878 = vmatpush1.xpose.msra.mxu0 0.0
    %879 = vmatprep.subr.mxu0 0.0
    %880 = vmatpush1.xpose.msra.mxu0 0.0
    %881 = vmatprep.subr.mxu0 0.0
    %882 = vmatpush1.xpose.msra.mxu0 0.0
    %883 = vmatprep.subr.mxu0 0.0
    %884 = vmatpush1.xpose.msra.mxu0 0.0
    %885 = vmatprep.mubr.f32.mxu0 0.0
    %886 = vmatmul.mubr.f32.gmra.mrb[0].mxu0 %v813
    %v887 = vpop.f32.mrb[0].mxu0
    %v888 = vadd.f32 0.0, %v887
    %v889 = vpop.f32.mrb[0].mxu0
    %890 = vdwg.mxu0
    %v891 = vmul.f32 %v888, 0.35355338
    %v892 = vsel %vm338, %v891, -inf
    %893 = vmax.xlane.f32.xlu0 %v892
    %v894 = vpop.xlane.xlu0 %893
    %v895 = vsub.f32 %v891, %v894
    %v896 = vmul.f32 %v895, 1.442695
    %v897 = vpow.pop %v896
    %v898 = vsel %vm338, %v897, 0.0
    %899 = vadd.xlane.f32.xlu0 %v898
    %v900 = vpop.xlane.xlu0 %899
    %v901 = vrcp.pop %v900
    %v902 = vmul.f32 %v897, %v901
    %903 = vrot.lane.b32.xlu0 %v235, 72
    %v904 = vpop.permute.xlu0 %903
    %905 = vrot.lane.b32.xlu0 %v240, 72
    %v906 = vpop.permute.xlu0 %905
    %907 = vrot.lane.b32.xlu0 %v255, 72
    %v908 = vpop.permute.xlu0 %907
    %v913 = vsel %vm338, %v902, 0
    %915 = vmatprep.subr.mxu0 0.0
    %916 = vmatpush1.msra.mxu0 %v904
    %917 = vmatprep.subr.mxu0 0.0
    %918 = vmatpush1.msra.mxu0 %v906
    %919 = vmatprep.subr.mxu0 0.0
    %920 = vmatpush1.msra.mxu0 %v908
    %921 = vmatprep.subr.mxu0 0.0
    %922 = vmatpush1.msra.mxu0 0.0
    %923 = vmatprep.subr.mxu0 0.0
    %924 = vmatpush1.msra.mxu0 0.0
    %925 = vmatprep.subr.mxu0 0.0
    %926 = vmatpush1.msra.mxu0 0.0
    %927 = vmatprep.subr.mxu0 0.0
    %928 = vmatpush1.msra.mxu0 0.0
    %929 = vmatprep.subr.mxu0 0.0
    %930 = vmatpush1.msra.mxu0 0.0
    %931 = vmatprep.subr.mxu0 0.0
    %932 = vmatpush1.msra.mxu0 0.0
    %933 = vmatprep.subr.mxu0 0.0
    %934 = vmatpush1.msra.mxu0 0.0
    %935 = vmatprep.subr.mxu0 0.0
    %936 = vmatpush1.msra.mxu0 0.0
    %937 = vmatprep.subr.mxu0 0.0
    %938 = vmatpush1.msra.mxu0 0.0
    %939 = vmatprep.subr.mxu0 0.0
    %940 = vmatpush1.msra.mxu0 0.0
    %941 = vmatprep.subr.mxu0 0.0
    %942 = vmatpush1.msra.mxu0 0.0
    %943 = vmatprep.subr.mxu0 0.0
    %944 = vmatpush1.msra.mxu0 0.0
    %945 = vmatprep.subr.mxu0 0.0
    %946 = vmatpush1.msra.mxu0 0.0
    %947 = vmatprep.subr.mxu0 0.0
    %948 = vmatpush1.msra.mxu0 0.0
    %949 = vmatprep.subr.mxu0 0.0
    %950 = vmatpush1.msra.mxu0 0.0
    %951 = vmatprep.subr.mxu0 0.0
    %952 = vmatpush1.msra.mxu0 0.0
    %953 = vmatprep.subr.mxu0 0.0
    %954 = vmatpush1.msra.mxu0 0.0
    %955 = vmatprep.subr.mxu0 0.0
    %956 = vmatpush1.msra.mxu0 0.0
    %957 = vmatprep.subr.mxu0 0.0
    %958 = vmatpush1.msra.mxu0 0.0
    %959 = vmatprep.subr.mxu0 0.0
    %960 = vmatpush1.msra.mxu0 0.0
    %961 = vmatprep.subr.mxu0 0.0
    %962 = vmatpush1.msra.mxu0 0.0
    %963 = vmatprep.subr.mxu0 0.0
    %964 = vmatpush1.msra.mxu0 0.0
    %965 = vmatprep.subr.mxu0 0.0
    %966 = vmatpush1.msra.mxu0 0.0
    %967 = vmatprep.subr.mxu0 0.0
    %968 = vmatpush1.msra.mxu0 0.0
    %969 = vmatprep.subr.mxu0 0.0
    %970 = vmatpush1.msra.mxu0 0.0
    %971 = vmatprep.subr.mxu0 0.0
    %972 = vmatpush1.msra.mxu0 0.0
    %973 = vmatprep.subr.mxu0 0.0
    %974 = vmatpush1.msra.mxu0 0.0
    %975 = vmatprep.subr.mxu0 0.0
    %976 = vmatpush1.msra.mxu0 0.0
    %977 = vmatprep.subr.mxu0 0.0
    %978 = vmatpush1.msra.mxu0 0.0
    %979 = vmatprep.mubr.f32.mxu0 0.0
    %980 = vmatmul.mubr.f32.gmra.mrb[0].mxu0 %v913
    %v981 = vpop.f32.mrb[0].mxu0
    %v982 = vadd.f32 0.0, %v981
    %v983 = vpop.f32.mrb[0].mxu0
    %984 = vdwg.mxu0
    %986 = vrot.lane.b32.xlu0 %v982, 24
    %v987 = vpop.permute.xlu0 %986
    %vm989 = vcmask 261312
    %990 = vst.msk [vmem:[#allocation2] sm:$0xff] %vm989, %v987
    %992 = vrot.lane.b32.xlu0 %v133, 96
    %v993 = vpop.permute.xlu0 %992
    %v994 = vsel %vm256, %v133, 0
    %v997 = vsel %vm256, %v245, 0
    %v1000 = vsel %vm256, %v250, 0
    %v1002 = vsel %vm256, %v993, 0
    %1004 = vmatprep.subr.mxu0 0.0
    %1005 = vmatpush1.xpose.msra.mxu0 %v997
    %1006 = vmatprep.subr.mxu0 0.0
    %1007 = vmatpush1.xpose.msra.mxu0 %v1000
    %1008 = vmatprep.subr.mxu0 0.0
    %1009 = vmatpush1.xpose.msra.mxu0 %v1002
    %1010 = vmatprep.subr.mxu0 0.0
    %1011 = vmatpush1.xpose.msra.mxu0 0.0
    %1012 = vmatprep.subr.mxu0 0.0
    %1013 = vmatpush1.xpose.msra.mxu0 0.0
    %1014 = vmatprep.subr.mxu0 0.0
    %1015 = vmatpush1.xpose.msra.mxu0 0.0
    %1016 = vmatprep.subr.mxu0 0.0
    %1017 = vmatpush1.xpose.msra.mxu0 0.0
    %1018 = vmatprep.subr.mxu0 0.0
    %1019 = vmatpush1.xpose.msra.mxu0 0.0
    %1020 = vmatprep.subr.mxu0 0.0
    %1021 = vmatpush1.xpose.msra.mxu0 0.0
    %1022 = vmatprep.subr.mxu0 0.0
    %1023 = vmatpush1.xpose.msra.mxu0 0.0
    %1024 = vmatprep.subr.mxu0 0.0
    %1025 = vmatpush1.xpose.msra.mxu0 0.0
    %1026 = vmatprep.subr.mxu0 0.0
    %1027 = vmatpush1.xpose.msra.mxu0 0.0
    %1028 = vmatprep.subr.mxu0 0.0
    %1029 = vmatpush1.xpose.msra.mxu0 0.0
    %1030 = vmatprep.subr.mxu0 0.0
    %1031 = vmatpush1.xpose.msra.mxu0 0.0
    %1032 = vmatprep.subr.mxu0 0.0
    %1033 = vmatpush1.xpose.msra.mxu0 0.0
    %1034 = vmatprep.subr.mxu0 0.0
    %1035 = vmatpush1.xpose.msra.mxu0 0.0
    %1036 = vmatprep.subr.mxu0 0.0
    %1037 = vmatpush1.xpose.msra.mxu0 0.0
    %1038 = vmatprep.subr.mxu0 0.0
    %1039 = vmatpush1.xpose.msra.mxu0 0.0
    %1040 = vmatprep.subr.mxu0 0.0
    %1041 = vmatpush1.xpose.msra.mxu0 0.0
    %1042 = vmatprep.subr.mxu0 0.0
    %1043 = vmatpush1.xpose.msra.mxu0 0.0
    %1044 = vmatprep.subr.mxu0 0.0
    %1045 = vmatpush1.xpose.msra.mxu0 0.0
    %1046 = vmatprep.subr.mxu0 0.0
    %1047 = vmatpush1.xpose.msra.mxu0 0.0
    %1048 = vmatprep.subr.mxu0 0.0
    %1049 = vmatpush1.xpose.msra.mxu0 0.0
    %1050 = vmatprep.subr.mxu0 0.0
    %1051 = vmatpush1.xpose.msra.mxu0 0.0
    %1052 = vmatprep.subr.mxu0 0.0
    %1053 = vmatpush1.xpose.msra.mxu0 0.0
    %1054 = vmatprep.subr.mxu0 0.0
    %1055 = vmatpush1.xpose.msra.mxu0 0.0
    %1056 = vmatprep.subr.mxu0 0.0
    %1057 = vmatpush1.xpose.msra.mxu0 0.0
    %1058 = vmatprep.subr.mxu0 0.0
    %1059 = vmatpush1.xpose.msra.mxu0 0.0
    %1060 = vmatprep.subr.mxu0 0.0
    %1061 = vmatpush1.xpose.msra.mxu0 0.0
    %1062 = vmatprep.subr.mxu0 0.0
    %1063 = vmatpush1.xpose.msra.mxu0 0.0
    %1064 = vmatprep.subr.mxu0 0.0
    %1065 = vmatpush1.xpose.msra.mxu0 0.0
    %1066 = vmatprep.subr.mxu0 0.0
    %1067 = vmatpush1.xpose.msra.mxu0 0.0
    %1068 = vmatprep.mubr.f32.mxu0 0.0
    %1069 = vmatmul.mubr.f32.gmra.mrb[0].mxu0 %v994
    %v1070 = vpop.f32.mrb[0].mxu0
    %v1071 = vadd.f32 0.0, %v1070
    %v1072 = vpop.f32.mrb[0].mxu0
    %1073 = vdwg.mxu0
    %v1074 = vmul.f32 %v1071, 0.35355338
    %v1075 = vsel %vm338, %v1074, -inf
    %1076 = vmax.xlane.f32.xlu0 %v1075
    %v1077 = vpop.xlane.xlu0 %1076
    %v1078 = vsub.f32 %v1074, %v1077
    %v1079 = vmul.f32 %v1078, 1.442695
    %v1080 = vpow.pop %v1079
    %v1081 = vsel %vm338, %v1080, 0.0
    %1082 = vadd.xlane.f32.xlu0 %v1081
    %v1083 = vpop.xlane.xlu0 %1082
    %v1084 = vrcp.pop %v1083
    %v1085 = vmul.f32 %v1080, %v1084
    %1086 = vrot.lane.b32.xlu0 %v245, 96
    %v1087 = vpop.permute.xlu0 %1086
    %1088 = vrot.lane.b32.xlu0 %v250, 96
    %v1089 = vpop.permute.xlu0 %1088
    %1090 = vrot.lane.b32.xlu0 %v993, 96
    %v1091 = vpop.permute.xlu0 %1090
    %v1096 = vsel %vm338, %v1085, 0
    %1098 = vmatprep.subr.mxu0 0.0
    %1099 = vmatpush1.msra.mxu0 %v1087
    %1100 = vmatprep.subr.mxu0 0.0
    %1101 = vmatpush1.msra.mxu0 %v1089
    %1102 = vmatprep.subr.mxu0 0.0
    %1103 = vmatpush1.msra.mxu0 %v1091
    %1104 = vmatprep.subr.mxu0 0.0
    %1105 = vmatpush1.msra.mxu0 0.0
    %1106 = vmatprep.subr.mxu0 0.0
    %1107 = vmatpush1.msra.mxu0 0.0
    %1108 = vmatprep.subr.mxu0 0.0
    %1109 = vmatpush1.msra.mxu0 0.0
    %1110 = vmatprep.subr.mxu0 0.0
    %1111 = vmatpush1.msra.mxu0 0.0
    %1112 = vmatprep.subr.mxu0 0.0
    %1113 = vmatpush1.msra.mxu0 0.0
    %1114 = vmatprep.subr.mxu0 0.0
    %1115 = vmatpush1.msra.mxu0 0.0
    %1116 = vmatprep.subr.mxu0 0.0
    %1117 = vmatpush1.msra.mxu0 0.0
    %1118 = vmatprep.subr.mxu0 0.0
    %1119 = vmatpush1.msra.mxu0 0.0
    %1120 = vmatprep.subr.mxu0 0.0
    %1121 = vmatpush1.msra.mxu0 0.0
    %1122 = vmatprep.subr.mxu0 0.0
    %1123 = vmatpush1.msra.mxu0 0.0
    %1124 = vmatprep.subr.mxu0 0.0
    %1125 = vmatpush1.msra.mxu0 0.0
    %1126 = vmatprep.subr.mxu0 0.0
    %1127 = vmatpush1.msra.mxu0 0.0
    %1128 = vmatprep.subr.mxu0 0.0
    %1129 = vmatpush1.msra.mxu0 0.0
    %1130 = vmatprep.subr.mxu0 0.0
    %1131 = vmatpush1.msra.mxu0 0.0
    %1132 = vmatprep.subr.mxu0 0.0
    %1133 = vmatpush1.msra.mxu0 0.0
    %1134 = vmatprep.subr.mxu0 0.0
    %1135 = vmatpush1.msra.mxu0 0.0
    %1136 = vmatprep.subr.mxu0 0.0
    %1137 = vmatpush1.msra.mxu0 0.0
    %1138 = vmatprep.subr.mxu0 0.0
    %1139 = vmatpush1.msra.mxu0 0.0
    %1140 = vmatprep.subr.mxu0 0.0
    %1141 = vmatpush1.msra.mxu0 0.0
    %1142 = vmatprep.subr.mxu0 0.0
    %1143 = vmatpush1.msra.mxu0 0.0
    %1144 = vmatprep.subr.mxu0 0.0
    %1145 = vmatpush1.msra.mxu0 0.0
    %1146 = vmatprep.subr.mxu0 0.0
    %1147 = vmatpush1.msra.mxu0 0.0
    %1148 = vmatprep.subr.mxu0 0.0
    %1149 = vmatpush1.msra.mxu0 0.0
    %1150 = vmatprep.subr.mxu0 0.0
    %1151 = vmatpush1.msra.mxu0 0.0
    %1152 = vmatprep.subr.mxu0 0.0
    %1153 = vmatpush1.msra.mxu0 0.0
    %1154 = vmatprep.subr.mxu0 0.0
    %1155 = vmatpush1.msra.mxu0 0.0
    %1156 = vmatprep.subr.mxu0 0.0
    %1157 = vmatpush1.msra.mxu0 0.0
    %1158 = vmatprep.subr.mxu0 0.0
    %1159 = vmatpush1.msra.mxu0 0.0
    %1160 = vmatprep.subr.mxu0 0.0
    %1161 = vmatpush1.msra.mxu0 0.0
    %1162 = vmatprep.mubr.f32.mxu0 0.0
    %1163 = vmatmul.mubr.f32.gmra.mrb[0].mxu0 %v1096
    %v1164 = vpop.f32.mrb[0].mxu0
    %v1165 = vadd.f32 0.0, %v1164
    %v1166 = vpop.f32.mrb[0].mxu0
    %1167 = vdwg.mxu0
    %1168 = vst.msk [vmem:[#allocation2 + $0x8] sm:$0xff] %vm256, %v1165
    %1169 = vrot.lane.b32.xlu0 %v133, 120
    %v1170 = vpop.permute.xlu0 %1169
    %1171 = vrot.lane.b32.xlu0 %v245, 120
    %v1172 = vpop.permute.xlu0 %1171
    %1173 = vrot.lane.b32.xlu0 %v250, 120
    %v1174 = vpop.permute.xlu0 %1173
    %1175 = vrot.lane.b32.xlu0 %v993, 120
    %v1176 = vpop.permute.xlu0 %1175
    %v1177 = vsel %vm256, %v1170, 0
    %v1179 = vsel %vm256, %v1172, 0
    %v1181 = vsel %vm256, %v1174, 0
    %v1183 = vsel %vm256, %v1176, 0
    %1185 = vmatprep.subr.mxu0 0.0
    %1186 = vmatpush1.xpose.msra.mxu0 %v1179
    %1187 = vmatprep.subr.mxu0 0.0
    %1188 = vmatpush1.xpose.msra.mxu0 %v1181
    %1189 = vmatprep.subr.mxu0 0.0
    %1190 = vmatpush1.xpose.msra.mxu0 %v1183
    %1191 = vmatprep.subr.mxu0 0.0
    %1192 = vmatpush1.xpose.msra.mxu0 0.0
    %1193 = vmatprep.subr.mxu0 0.0
    %1194 = vmatpush1.xpose.msra.mxu0 0.0
    %1195 = vmatprep.subr.mxu0 0.0
    %1196 = vmatpush1.xpose.msra.mxu0 0.0
    %1197 = vmatprep.subr.mxu0 0.0
    %1198 = vmatpush1.xpose.msra.mxu0 0.0
    %1199 = vmatprep.subr.mxu0 0.0
    %1200 = vmatpush1.xpose.msra.mxu0 0.0
    %1201 = vmatprep.subr.mxu0 0.0
    %1202 = vmatpush1.xpose.msra.mxu0 0.0
    %1203 = vmatprep.subr.mxu0 0.0
    %1204 = vmatpush1.xpose.msra.mxu0 0.0
    %1205 = vmatprep.subr.mxu0 0.0
    %1206 = vmatpush1.xpose.msra.mxu0 0.0
    %1207 = vmatprep.subr.mxu0 0.0
    %1208 = vmatpush1.xpose.msra.mxu0 0.0
    %1209 = vmatprep.subr.mxu0 0.0
    %1210 = vmatpush1.xpose.msra.mxu0 0.0
    %1211 = vmatprep.subr.mxu0 0.0
    %1212 = vmatpush1.xpose.msra.mxu0 0.0
    %1213 = vmatprep.subr.mxu0 0.0
    %1214 = vmatpush1.xpose.msra.mxu0 0.0
    %1215 = vmatprep.subr.mxu0 0.0
    %1216 = vmatpush1.xpose.msra.mxu0 0.0
    %1217 = vmatprep.subr.mxu0 0.0
    %1218 = vmatpush1.xpose.msra.mxu0 0.0
    %1219 = vmatprep.subr.mxu0 0.0
    %1220 = vmatpush1.xpose.msra.mxu0 0.0
    %1221 = vmatprep.subr.mxu0 0.0
    %1222 = vmatpush1.xpose.msra.mxu0 0.0
    %1223 = vmatprep.subr.mxu0 0.0
    %1224 = vmatpush1.xpose.msra.mxu0 0.0
    %1225 = vmatprep.subr.mxu0 0.0
    %1226 = vmatpush1.xpose.msra.mxu0 0.0
    %1227 = vmatprep.subr.mxu0 0.0
    %1228 = vmatpush1.xpose.msra.mxu0 0.0
    %1229 = vmatprep.subr.mxu0 0.0
    %1230 = vmatpush1.xpose.msra.mxu0 0.0
    %1231 = vmatprep.subr.mxu0 0.0
    %1232 = vmatpush1.xpose.msra.mxu0 0.0
    %1233 = vmatprep.subr.mxu0 0.0
    %1234 = vmatpush1.xpose.msra.mxu0 0.0
    %1235 = vmatprep.subr.mxu0 0.0
    %1236 = vmatpush1.xpose.msra.mxu0 0.0
    %1237 = vmatprep.subr.mxu0 0.0
    %1238 = vmatpush1.xpose.msra.mxu0 0.0
    %1239 = vmatprep.subr.mxu0 0.0
    %1240 = vmatpush1.xpose.msra.mxu0 0.0
    %1241 = vmatprep.subr.mxu0 0.0
    %1242 = vmatpush1.xpose.msra.mxu0 0.0
    %1243 = vmatprep.subr.mxu0 0.0
    %1244 = vmatpush1.xpose.msra.mxu0 0.0
    %1245 = vmatprep.subr.mxu0 0.0
    %1246 = vmatpush1.xpose.msra.mxu0 0.0
    %1247 = vmatprep.subr.mxu0 0.0
    %1248 = vmatpush1.xpose.msra.mxu0 0.0
    %1249 = vmatprep.mubr.f32.mxu0 0.0
    %1250 = vmatmul.mubr.f32.gmra.mrb[0].mxu0 %v1177
    %v1251 = vpop.f32.mrb[0].mxu0
    %v1252 = vadd.f32 0.0, %v1251
    %v1253 = vpop.f32.mrb[0].mxu0
    %1254 = vdwg.mxu0
    %v1255 = vmul.f32 %v1252, 0.35355338
    %v1256 = vsel %vm338, %v1255, -inf
    %1257 = vmax.xlane.f32.xlu0 %v1256
    %v1258 = vpop.xlane.xlu0 %1257
    %v1259 = vsub.f32 %v1255, %v1258
    %v1260 = vmul.f32 %v1259, 1.442695
    %v1261 = vpow.pop %v1260
    %v1262 = vsel %vm338, %v1261, 0.0
    %1263 = vadd.xlane.f32.xlu0 %v1262
    %v1264 = vpop.xlane.xlu0 %1263
    %v1265 = vrcp.pop %v1264
    %v1266 = vmul.f32 %v1261, %v1265
    %1267 = vrot.lane.b32.xlu0 %v245, 88
    %v1268 = vpop.permute.xlu0 %1267
    %1269 = vrot.lane.b32.xlu0 %v250, 88
    %v1270 = vpop.permute.xlu0 %1269
    %1271 = vrot.lane.b32.xlu0 %v993, 88
    %v1272 = vpop.permute.xlu0 %1271
    %v1277 = vsel %vm338, %v1266, 0
    %1279 = vmatprep.subr.mxu0 0.0
    %1280 = vmatpush1.msra.mxu0 %v1268
    %1281 = vmatprep.subr.mxu0 0.0
    %1282 = vmatpush1.msra.mxu0 %v1270
    %1283 = vmatprep.subr.mxu0 0.0
    %1284 = vmatpush1.msra.mxu0 %v1272
    %1285 = vmatprep.subr.mxu0 0.0
    %1286 = vmatpush1.msra.mxu0 0.0
    %1287 = vmatprep.subr.mxu0 0.0
    %1288 = vmatpush1.msra.mxu0 0.0
    %1289 = vmatprep.subr.mxu0 0.0
    %1290 = vmatpush1.msra.mxu0 0.0
    %1291 = vmatprep.subr.mxu0 0.0
    %1292 = vmatpush1.msra.mxu0 0.0
    %1293 = vmatprep.subr.mxu0 0.0
    %1294 = vmatpush1.msra.mxu0 0.0
    %1295 = vmatprep.subr.mxu0 0.0
    %1296 = vmatpush1.msra.mxu0 0.0
    %1297 = vmatprep.subr.mxu0 0.0
    %1298 = vmatpush1.msra.mxu0 0.0
    %1299 = vmatprep.subr.mxu0 0.0
    %1300 = vmatpush1.msra.mxu0 0.0
    %1301 = vmatprep.subr.mxu0 0.0
    %1302 = vmatpush1.msra.mxu0 0.0
    %1303 = vmatprep.subr.mxu0 0.0
    %1304 = vmatpush1.msra.mxu0 0.0
    %1305 = vmatprep.subr.mxu0 0.0
    %1306 = vmatpush1.msra.mxu0 0.0
    %1307 = vmatprep.subr.mxu0 0.0
    %1308 = vmatpush1.msra.mxu0 0.0
    %1309 = vmatprep.subr.mxu0 0.0
    %1310 = vmatpush1.msra.mxu0 0.0
    %1311 = vmatprep.subr.mxu0 0.0
    %1312 = vmatpush1.msra.mxu0 0.0
    %1313 = vmatprep.subr.mxu0 0.0
    %1314 = vmatpush1.msra.mxu0 0.0
    %1315 = vmatprep.subr.mxu0 0.0
    %1316 = vmatpush1.msra.mxu0 0.0
    %1317 = vmatprep.subr.mxu0 0.0
    %1318 = vmatpush1.msra.mxu0 0.0
    %1319 = vmatprep.subr.mxu0 0.0
    %1320 = vmatpush1.msra.mxu0 0.0
    %1321 = vmatprep.subr.mxu0 0.0
    %1322 = vmatpush1.msra.mxu0 0.0
    %1323 = vmatprep.subr.mxu0 0.0
    %1324 = vmatpush1.msra.mxu0 0.0
    %1325 = vmatprep.subr.mxu0 0.0
    %1326 = vmatpush1.msra.mxu0 0.0
    %1327 = vmatprep.subr.mxu0 0.0
    %1328 = vmatpush1.msra.mxu0 0.0
    %1329 = vmatprep.subr.mxu0 0.0
    %1330 = vmatpush1.msra.mxu0 0.0
    %1331 = vmatprep.subr.mxu0 0.0
    %1332 = vmatpush1.msra.mxu0 0.0
    %1333 = vmatprep.subr.mxu0 0.0
    %1334 = vmatpush1.msra.mxu0 0.0
    %1335 = vmatprep.subr.mxu0 0.0
    %1336 = vmatpush1.msra.mxu0 0.0
    %1337 = vmatprep.subr.mxu0 0.0
    %1338 = vmatpush1.msra.mxu0 0.0
    %1339 = vmatprep.subr.mxu0 0.0
    %1340 = vmatpush1.msra.mxu0 0.0
    %1341 = vmatprep.subr.mxu0 0.0
    %1342 = vmatpush1.msra.mxu0 0.0
    %1343 = vmatprep.mubr.f32.mxu0 0.0
    %1344 = vmatmul.mubr.f32.gmra.mrb[0].mxu0 %v1277
    %v1345 = vpop.f32.mrb[0].mxu0
    %v1346 = vadd.f32 0.0, %v1345
    %v1347 = vpop.f32.mrb[0].mxu0
    %1348 = vdwg.mxu0
    %1350 = vrot.lane.b32.xlu0 %v1346, 8
    %v1351 = vpop.permute.xlu0 %1350
    %1353 = vst.msk [vmem:[#allocation2 + $0x8] sm:$0xff] %vm617, %v1351
    %1354 = vrot.lane.b32.xlu0 %v133, 112
    %v1355 = vpop.permute.xlu0 %1354
    %1356 = vrot.lane.b32.xlu0 %v245, 112
    %v1357 = vpop.permute.xlu0 %1356
    %1358 = vrot.lane.b32.xlu0 %v250, 112
    %v1359 = vpop.permute.xlu0 %1358
    %1360 = vrot.lane.b32.xlu0 %v993, 112
    %v1361 = vpop.permute.xlu0 %1360
    %v1362 = vsel %vm256, %v1355, 0
    %v1364 = vsel %vm256, %v1357, 0
    %v1366 = vsel %vm256, %v1359, 0
    %v1368 = vsel %vm256, %v1361, 0
    %1370 = vmatprep.subr.mxu0 0.0
    %1371 = vmatpush1.xpose.msra.mxu0 %v1364
    %1372 = vmatprep.subr.mxu0 0.0
    %1373 = vmatpush1.xpose.msra.mxu0 %v1366
    %1374 = vmatprep.subr.mxu0 0.0
    %1375 = vmatpush1.xpose.msra.mxu0 %v1368
    %1376 = vmatprep.subr.mxu0 0.0
    %1377 = vmatpush1.xpose.msra.mxu0 0.0
    %1378 = vmatprep.subr.mxu0 0.0
    %1379 = vmatpush1.xpose.msra.mxu0 0.0
    %1380 = vmatprep.subr.mxu0 0.0
    %1381 = vmatpush1.xpose.msra.mxu0 0.0
    %1382 = vmatprep.subr.mxu0 0.0
    %1383 = vmatpush1.xpose.msra.mxu0 0.0
    %1384 = vmatprep.subr.mxu0 0.0
    %1385 = vmatpush1.xpose.msra.mxu0 0.0
    %1386 = vmatprep.subr.mxu0 0.0
    %1387 = vmatpush1.xpose.msra.mxu0 0.0
    %1388 = vmatprep.subr.mxu0 0.0
    %1389 = vmatpush1.xpose.msra.mxu0 0.0
    %1390 = vmatprep.subr.mxu0 0.0
    %1391 = vmatpush1.xpose.msra.mxu0 0.0
    %1392 = vmatprep.subr.mxu0 0.0
    %1393 = vmatpush1.xpose.msra.mxu0 0.0
    %1394 = vmatprep.subr.mxu0 0.0
    %1395 = vmatpush1.xpose.msra.mxu0 0.0
    %1396 = vmatprep.subr.mxu0 0.0
    %1397 = vmatpush1.xpose.msra.mxu0 0.0
    %1398 = vmatprep.subr.mxu0 0.0
    %1399 = vmatpush1.xpose.msra.mxu0 0.0
    %1400 = vmatprep.subr.mxu0 0.0
    %1401 = vmatpush1.xpose.msra.mxu0 0.0
    %1402 = vmatprep.subr.mxu0 0.0
    %1403 = vmatpush1.xpose.msra.mxu0 0.0
    %1404 = vmatprep.subr.mxu0 0.0
    %1405 = vmatpush1.xpose.msra.mxu0 0.0
    %1406 = vmatprep.subr.mxu0 0.0
    %1407 = vmatpush1.xpose.msra.mxu0 0.0
    %1408 = vmatprep.subr.mxu0 0.0
    %1409 = vmatpush1.xpose.msra.mxu0 0.0
    %1410 = vmatprep.subr.mxu0 0.0
    %1411 = vmatpush1.xpose.msra.mxu0 0.0
    %1412 = vmatprep.subr.mxu0 0.0
    %1413 = vmatpush1.xpose.msra.mxu0 0.0
    %1414 = vmatprep.subr.mxu0 0.0
    %1415 = vmatpush1.xpose.msra.mxu0 0.0
    %1416 = vmatprep.subr.mxu0 0.0
    %1417 = vmatpush1.xpose.msra.mxu0 0.0
    %1418 = vmatprep.subr.mxu0 0.0
    %1419 = vmatpush1.xpose.msra.mxu0 0.0
    %1420 = vmatprep.subr.mxu0 0.0
    %1421 = vmatpush1.xpose.msra.mxu0 0.0
    %1422 = vmatprep.subr.mxu0 0.0
    %1423 = vmatpush1.xpose.msra.mxu0 0.0
    %1424 = vmatprep.subr.mxu0 0.0
    %1425 = vmatpush1.xpose.msra.mxu0 0.0
    %1426 = vmatprep.subr.mxu0 0.0
    %1427 = vmatpush1.xpose.msra.mxu0 0.0
    %1428 = vmatprep.subr.mxu0 0.0
    %1429 = vmatpush1.xpose.msra.mxu0 0.0
    %1430 = vmatprep.subr.mxu0 0.0
    %1431 = vmatpush1.xpose.msra.mxu0 0.0
    %1432 = vmatprep.subr.mxu0 0.0
    %1433 = vmatpush1.xpose.msra.mxu0 0.0
    %1434 = vmatprep.mubr.f32.mxu0 0.0
    %1435 = vmatmul.mubr.f32.gmra.mrb[0].mxu0 %v1362
    %v1436 = vpop.f32.mrb[0].mxu0
    %v1437 = vadd.f32 0.0, %v1436
    %v1438 = vpop.f32.mrb[0].mxu0
    %1439 = vdwg.mxu0
    %v1440 = vmul.f32 %v1437, 0.35355338
    %v1441 = vsel %vm338, %v1440, -inf
    %1442 = vmax.xlane.f32.xlu0 %v1441
    %v1443 = vpop.xlane.xlu0 %1442
    %v1444 = vsub.f32 %v1440, %v1443
    %v1445 = vmul.f32 %v1444, 1.442695
    %v1446 = vpow.pop %v1445
    %v1447 = vsel %vm338, %v1446, 0.0
    %1448 = vadd.xlane.f32.xlu0 %v1447
    %v1449 = vpop.xlane.xlu0 %1448
    %v1450 = vrcp.pop %v1449
    %v1451 = vmul.f32 %v1446, %v1450
    %1452 = vrot.lane.b32.xlu0 %v245, 80
    %v1453 = vpop.permute.xlu0 %1452
    %1454 = vrot.lane.b32.xlu0 %v250, 80
    %v1455 = vpop.permute.xlu0 %1454
    %1456 = vrot.lane.b32.xlu0 %v993, 80
    %v1457 = vpop.permute.xlu0 %1456
    %v1462 = vsel %vm338, %v1451, 0
    %1464 = vmatprep.subr.mxu0 0.0
    %1465 = vmatpush1.msra.mxu0 %v1453
    %1466 = vmatprep.subr.mxu0 0.0
    %1467 = vmatpush1.msra.mxu0 %v1455
    %1468 = vmatprep.subr.mxu0 0.0
    %1469 = vmatpush1.msra.mxu0 %v1457
    %1470 = vmatprep.subr.mxu0 0.0
    %1471 = vmatpush1.msra.mxu0 0.0
    %1472 = vmatprep.subr.mxu0 0.0
    %1473 = vmatpush1.msra.mxu0 0.0
    %1474 = vmatprep.subr.mxu0 0.0
    %1475 = vmatpush1.msra.mxu0 0.0
    %1476 = vmatprep.subr.mxu0 0.0
    %1477 = vmatpush1.msra.mxu0 0.0
    %1478 = vmatprep.subr.mxu0 0.0
    %1479 = vmatpush1.msra.mxu0 0.0
    %1480 = vmatprep.subr.mxu0 0.0
    %1481 = vmatpush1.msra.mxu0 0.0
    %1482 = vmatprep.subr.mxu0 0.0
    %1483 = vmatpush1.msra.mxu0 0.0
    %1484 = vmatprep.subr.mxu0 0.0
    %1485 = vmatpush1.msra.mxu0 0.0
    %1486 = vmatprep.subr.mxu0 0.0
    %1487 = vmatpush1.msra.mxu0 0.0
    %1488 = vmatprep.subr.mxu0 0.0
    %1489 = vmatpush1.msra.mxu0 0.0
    %1490 = vmatprep.subr.mxu0 0.0
    %1491 = vmatpush1.msra.mxu0 0.0
    %1492 = vmatprep.subr.mxu0 0.0
    %1493 = vmatpush1.msra.mxu0 0.0
    %1494 = vmatprep.subr.mxu0 0.0
    %1495 = vmatpush1.msra.mxu0 0.0
    %1496 = vmatprep.subr.mxu0 0.0
    %1497 = vmatpush1.msra.mxu0 0.0
    %1498 = vmatprep.subr.mxu0 0.0
    %1499 = vmatpush1.msra.mxu0 0.0
    %1500 = vmatprep.subr.mxu0 0.0
    %1501 = vmatpush1.msra.mxu0 0.0
    %1502 = vmatprep.subr.mxu0 0.0
    %1503 = vmatpush1.msra.mxu0 0.0
    %1504 = vmatprep.subr.mxu0 0.0
    %1505 = vmatpush1.msra.mxu0 0.0
    %1506 = vmatprep.subr.mxu0 0.0
    %1507 = vmatpush1.msra.mxu0 0.0
    %1508 = vmatprep.subr.mxu0 0.0
    %1509 = vmatpush1.msra.mxu0 0.0
    %1510 = vmatprep.subr.mxu0 0.0
    %1511 = vmatpush1.msra.mxu0 0.0
    %1512 = vmatprep.subr.mxu0 0.0
    %1513 = vmatpush1.msra.mxu0 0.0
    %1514 = vmatprep.subr.mxu0 0.0
    %1515 = vmatpush1.msra.mxu0 0.0
    %1516 = vmatprep.subr.mxu0 0.0
    %1517 = vmatpush1.msra.mxu0 0.0
    %1518 = vmatprep.subr.mxu0 0.0
    %1519 = vmatpush1.msra.mxu0 0.0
    %1520 = vmatprep.subr.mxu0 0.0
    %1521 = vmatpush1.msra.mxu0 0.0
    %1522 = vmatprep.subr.mxu0 0.0
    %1523 = vmatpush1.msra.mxu0 0.0
    %1524 = vmatprep.subr.mxu0 0.0
    %1525 = vmatpush1.msra.mxu0 0.0
    %1526 = vmatprep.subr.mxu0 0.0
    %1527 = vmatpush1.msra.mxu0 0.0
    %1528 = vmatprep.mubr.f32.mxu0 0.0
    %1529 = vmatmul.mubr.f32.gmra.mrb[0].mxu0 %v1462
    %v1530 = vpop.f32.mrb[0].mxu0
    %v1531 = vadd.f32 0.0, %v1530
    %v1532 = vpop.f32.mrb[0].mxu0
    %1533 = vdwg.mxu0
    %1535 = vrot.lane.b32.xlu0 %v1531, 16
    %v1536 = vpop.permute.xlu0 %1535
    %1538 = vst.msk [vmem:[#allocation2 + $0x8] sm:$0xff] %vm803, %v1536
    %1539 = vrot.lane.b32.xlu0 %v133, 104
    %v1540 = vpop.permute.xlu0 %1539
    %1541 = vrot.lane.b32.xlu0 %v245, 104
    %v1542 = vpop.permute.xlu0 %1541
    %1543 = vrot.lane.b32.xlu0 %v250, 104
    %v1544 = vpop.permute.xlu0 %1543
    %1545 = vrot.lane.b32.xlu0 %v993, 104
    %v1546 = vpop.permute.xlu0 %1545
    %v1547 = vsel %vm256, %v1540, 0
    %v1549 = vsel %vm256, %v1542, 0
    %v1551 = vsel %vm256, %v1544, 0
    %v1553 = vsel %vm256, %v1546, 0
    %1555 = vmatprep.subr.mxu0 0.0
    %1556 = vmatpush1.xpose.msra.mxu0 %v1549
    %1557 = vmatprep.subr.mxu0 0.0
    %1558 = vmatpush1.xpose.msra.mxu0 %v1551
    %1559 = vmatprep.subr.mxu0 0.0
    %1560 = vmatpush1.xpose.msra.mxu0 %v1553
    %1561 = vmatprep.subr.mxu0 0.0
    %1562 = vmatpush1.xpose.msra.mxu0 0.0
    %1563 = vmatprep.subr.mxu0 0.0
    %1564 = vmatpush1.xpose.msra.mxu0 0.0
    %1565 = vmatprep.subr.mxu0 0.0
    %1566 = vmatpush1.xpose.msra.mxu0 0.0
    %1567 = vmatprep.subr.mxu0 0.0
    %1568 = vmatpush1.xpose.msra.mxu0 0.0
    %1569 = vmatprep.subr.mxu0 0.0
    %1570 = vmatpush1.xpose.msra.mxu0 0.0
    %1571 = vmatprep.subr.mxu0 0.0
    %1572 = vmatpush1.xpose.msra.mxu0 0.0
    %1573 = vmatprep.subr.mxu0 0.0
    %1574 = vmatpush1.xpose.msra.mxu0 0.0
    %1575 = vmatprep.subr.mxu0 0.0
    %1576 = vmatpush1.xpose.msra.mxu0 0.0
    %1577 = vmatprep.subr.mxu0 0.0
    %1578 = vmatpush1.xpose.msra.mxu0 0.0
    %1579 = vmatprep.subr.mxu0 0.0
    %1580 = vmatpush1.xpose.msra.mxu0 0.0
    %1581 = vmatprep.subr.mxu0 0.0
    %1582 = vmatpush1.xpose.msra.mxu0 0.0
    %1583 = vmatprep.subr.mxu0 0.0
    %1584 = vmatpush1.xpose.msra.mxu0 0.0
    %1585 = vmatprep.subr.mxu0 0.0
    %1586 = vmatpush1.xpose.msra.mxu0 0.0
    %1587 = vmatprep.subr.mxu0 0.0
    %1588 = vmatpush1.xpose.msra.mxu0 0.0
    %1589 = vmatprep.subr.mxu0 0.0
    %1590 = vmatpush1.xpose.msra.mxu0 0.0
    %1591 = vmatprep.subr.mxu0 0.0
    %1592 = vmatpush1.xpose.msra.mxu0 0.0
    %1593 = vmatprep.subr.mxu0 0.0
    %1594 = vmatpush1.xpose.msra.mxu0 0.0
    %1595 = vmatprep.subr.mxu0 0.0
    %1596 = vmatpush1.xpose.msra.mxu0 0.0
    %1597 = vmatprep.subr.mxu0 0.0
    %1598 = vmatpush1.xpose.msra.mxu0 0.0
    %1599 = vmatprep.subr.mxu0 0.0
    %1600 = vmatpush1.xpose.msra.mxu0 0.0
    %1601 = vmatprep.subr.mxu0 0.0
    %1602 = vmatpush1.xpose.msra.mxu0 0.0
    %1603 = vmatprep.subr.mxu0 0.0
    %1604 = vmatpush1.xpose.msra.mxu0 0.0
    %1605 = vmatprep.subr.mxu0 0.0
    %1606 = vmatpush1.xpose.msra.mxu0 0.0
    %1607 = vmatprep.subr.mxu0 0.0
    %1608 = vmatpush1.xpose.msra.mxu0 0.0
    %1609 = vmatprep.subr.mxu0 0.0
    %1610 = vmatpush1.xpose.msra.mxu0 0.0
    %1611 = vmatprep.subr.mxu0 0.0
    %1612 = vmatpush1.xpose.msra.mxu0 0.0
    %1613 = vmatprep.subr.mxu0 0.0
    %1614 = vmatpush1.xpose.msra.mxu0 0.0
    %1615 = vmatprep.subr.mxu0 0.0
    %1616 = vmatpush1.xpose.msra.mxu0 0.0
    %1617 = vmatprep.subr.mxu0 0.0
    %1618 = vmatpush1.xpose.msra.mxu0 0.0
    %1619 = vmatprep.mubr.f32.mxu0 0.0
    %1620 = vmatmul.mubr.f32.gmra.mrb[0].mxu0 %v1547
    %v1621 = vpop.f32.mrb[0].mxu0
    %v1622 = vadd.f32 0.0, %v1621
    %v1623 = vpop.f32.mrb[0].mxu0
    %1624 = vdwg.mxu0
    %v1625 = vmul.f32 %v1622, 0.35355338
    %v1626 = vsel %vm338, %v1625, -inf
    %1627 = vmax.xlane.f32.xlu0 %v1626
    %v1628 = vpop.xlane.xlu0 %1627
    %v1629 = vsub.f32 %v1625, %v1628
    %v1630 = vmul.f32 %v1629, 1.442695
    %v1631 = vpow.pop %v1630
    %v1632 = vsel %vm338, %v1631, 0.0
    %1633 = vadd.xlane.f32.xlu0 %v1632
    %v1634 = vpop.xlane.xlu0 %1633
    %v1635 = vrcp.pop %v1634
    %v1636 = vmul.f32 %v1631, %v1635
    %1637 = vrot.lane.b32.xlu0 %v245, 72
    %v1638 = vpop.permute.xlu0 %1637
    %1639 = vrot.lane.b32.xlu0 %v250, 72
    %v1640 = vpop.permute.xlu0 %1639
    %1641 = vrot.lane.b32.xlu0 %v993, 72
    %v1642 = vpop.permute.xlu0 %1641
    %v1647 = vsel %vm338, %v1636, 0
    %1649 = vmatprep.subr.mxu0 0.0
    %1650 = vmatpush1.msra.mxu0 %v1638
    %1651 = vmatprep.subr.mxu0 0.0
    %1652 = vmatpush1.msra.mxu0 %v1640
    %1653 = vmatprep.subr.mxu0 0.0
    %1654 = vmatpush1.msra.mxu0 %v1642
    %1655 = vmatprep.subr.mxu0 0.0
    %1656 = vmatpush1.msra.mxu0 0.0
    %1657 = vmatprep.subr.mxu0 0.0
    %1658 = vmatpush1.msra.mxu0 0.0
    %1659 = vmatprep.subr.mxu0 0.0
    %1660 = vmatpush1.msra.mxu0 0.0
    %1661 = vmatprep.subr.mxu0 0.0
    %1662 = vmatpush1.msra.mxu0 0.0
    %1663 = vmatprep.subr.mxu0 0.0
    %1664 = vmatpush1.msra.mxu0 0.0
    %1665 = vmatprep.subr.mxu0 0.0
    %1666 = vmatpush1.msra.mxu0 0.0
    %1667 = vmatprep.subr.mxu0 0.0
    %1668 = vmatpush1.msra.mxu0 0.0
    %1669 = vmatprep.subr.mxu0 0.0
    %1670 = vmatpush1.msra.mxu0 0.0
    %1671 = vmatprep.subr.mxu0 0.0
    %1672 = vmatpush1.msra.mxu0 0.0
    %1673 = vmatprep.subr.mxu0 0.0
    %1674 = vmatpush1.msra.mxu0 0.0
    %1675 = vmatprep.subr.mxu0 0.0
    %1676 = vmatpush1.msra.mxu0 0.0
    %1677 = vmatprep.subr.mxu0 0.0
    %1678 = vmatpush1.msra.mxu0 0.0
    %1679 = vmatprep.subr.mxu0 0.0
    %1680 = vmatpush1.msra.mxu0 0.0
    %1681 = vmatprep.subr.mxu0 0.0
    %1682 = vmatpush1.msra.mxu0 0.0
    %1683 = vmatprep.subr.mxu0 0.0
    %1684 = vmatpush1.msra.mxu0 0.0
    %1685 = vmatprep.subr.mxu0 0.0
    %1686 = vmatpush1.msra.mxu0 0.0
    %1687 = vmatprep.subr.mxu0 0.0
    %1688 = vmatpush1.msra.mxu0 0.0
    %1689 = vmatprep.subr.mxu0 0.0
    %1690 = vmatpush1.msra.mxu0 0.0
    %1691 = vmatprep.subr.mxu0 0.0
    %1692 = vmatpush1.msra.mxu0 0.0
    %1693 = vmatprep.subr.mxu0 0.0
    %1694 = vmatpush1.msra.mxu0 0.0
    %1695 = vmatprep.subr.mxu0 0.0
    %1696 = vmatpush1.msra.mxu0 0.0
    %1697 = vmatprep.subr.mxu0 0.0
    %1698 = vmatpush1.msra.mxu0 0.0
    %1699 = vmatprep.subr.mxu0 0.0
    %1700 = vmatpush1.msra.mxu0 0.0
    %1701 = vmatprep.subr.mxu0 0.0
    %1702 = vmatpush1.msra.mxu0 0.0
    %1703 = vmatprep.subr.mxu0 0.0
    %1704 = vmatpush1.msra.mxu0 0.0
    %1705 = vmatprep.subr.mxu0 0.0
    %1706 = vmatpush1.msra.mxu0 0.0
    %1707 = vmatprep.subr.mxu0 0.0
    %1708 = vmatpush1.msra.mxu0 0.0
    %1709 = vmatprep.subr.mxu0 0.0
    %1710 = vmatpush1.msra.mxu0 0.0
    %1711 = vmatprep.subr.mxu0 0.0
    %1712 = vmatpush1.msra.mxu0 0.0
    %1713 = vmatprep.mubr.f32.mxu0 0.0
    %1714 = vmatmul.mubr.f32.gmra.mrb[0].mxu0 %v1647
    %v1715 = vpop.f32.mrb[0].mxu0
    %v1716 = vadd.f32 0.0, %v1715
    %v1717 = vpop.f32.mrb[0].mxu0
    %1718 = vdwg.mxu0
    %1720 = vrot.lane.b32.xlu0 %v1716, 24
    %v1721 = vpop.permute.xlu0 %1720
    %1723 = vst.msk [vmem:[#allocation2 + $0x8] sm:$0xff] %vm989, %v1721
    %v1724 = vld [vmem:[#allocation2] sm:$0xff]
    %v1725 = vld [vmem:[#allocation2 + $0x8] sm:$0xff]
    %v1726 = vlaneseq
    %v1727 = vshrl.u32 %v1726, 7
    %v1728 = vsub.s32 1, %v1727
    %v1729 = vrot.slane %v49, %v1728
    %1730 = vrot.lane.b32.xlu0 %v41, 32
    %v1731 = vpop.permute.xlu0 %1730
    %1732 = vrot.lane.b32.xlu0 %v43, 32
    %v1733 = vpop.permute.xlu0 %1732
    %1734 = vrot.lane.b32.xlu0 %v45, 32
    %v1735 = vpop.permute.xlu0 %1734
    %1736 = vrot.lane.b32.xlu0 %v47, 32
    %v1737 = vpop.permute.xlu0 %1736
    %v1743 = vsel %vm54, %v1724, 0
    %v1746 = vsel %vm54, %v1725, 0
    %1748 = vmatprep.subr.mxu0 0.0
    %1749 = vmatpush1.msra.mxu0 %v1731
    %1750 = vmatprep.subr.mxu0 0.0
    %1751 = vmatpush1.msra.mxu0 %v1733
    %1752 = vmatprep.subr.mxu0 0.0
    %1753 = vmatpush1.msra.mxu0 %v1735
    %1754 = vmatprep.subr.mxu0 0.0
    %1755 = vmatpush1.msra.mxu0 %v1737
    %1756 = vmatprep.subr.mxu0 0.0
    %1757 = vmatpush1.msra.mxu0 0.0
    %1758 = vmatprep.subr.mxu0 0.0
    %1759 = vmatpush1.msra.mxu0 0.0
    %1760 = vmatprep.subr.mxu0 0.0
    %1761 = vmatpush1.msra.mxu0 0.0
    %1762 = vmatprep.subr.mxu0 0.0
    %1763 = vmatpush1.msra.mxu0 0.0
    %1764 = vmatprep.subr.mxu0 0.0
    %1765 = vmatpush1.msra.mxu0 0.0
    %1766 = vmatprep.subr.mxu0 0.0
    %1767 = vmatpush1.msra.mxu0 0.0
    %1768 = vmatprep.subr.mxu0 0.0
    %1769 = vmatpush1.msra.mxu0 0.0
    %1770 = vmatprep.subr.mxu0 0.0
    %1771 = vmatpush1.msra.mxu0 0.0
    %1772 = vmatprep.subr.mxu0 0.0
    %1773 = vmatpush1.msra.mxu0 0.0
    %1774 = vmatprep.subr.mxu0 0.0
    %1775 = vmatpush1.msra.mxu0 0.0
    %1776 = vmatprep.subr.mxu0 0.0
    %1777 = vmatpush1.msra.mxu0 0.0
    %1778 = vmatprep.subr.mxu0 0.0
    %1779 = vmatpush1.msra.mxu0 0.0
    %1780 = vmatprep.subr.mxu0 0.0
    %1781 = vmatpush1.msra.mxu0 0.0
    %1782 = vmatprep.subr.mxu0 0.0
    %1783 = vmatpush1.msra.mxu0 0.0
    %1784 = vmatprep.subr.mxu0 0.0
    %1785 = vmatpush1.msra.mxu0 0.0
    %1786 = vmatprep.subr.mxu0 0.0
    %1787 = vmatpush1.msra.mxu0 0.0
    %1788 = vmatprep.subr.mxu0 0.0
    %1789 = vmatpush1.msra.mxu0 0.0
    %1790 = vmatprep.subr.mxu0 0.0
    %1791 = vmatpush1.msra.mxu0 0.0
    %1792 = vmatprep.subr.mxu0 0.0
    %1793 = vmatpush1.msra.mxu0 0.0
    %1794 = vmatprep.subr.mxu0 0.0
    %1795 = vmatpush1.msra.mxu0 0.0
    %1796 = vmatprep.subr.mxu0 0.0
    %1797 = vmatpush1.msra.mxu0 0.0
    %1798 = vmatprep.subr.mxu0 0.0
    %1799 = vmatpush1.msra.mxu0 0.0
    %1800 = vmatprep.subr.mxu0 0.0
    %1801 = vmatpush1.msra.mxu0 0.0
    %1802 = vmatprep.subr.mxu0 0.0
    %1803 = vmatpush1.msra.mxu0 0.0
    %1804 = vmatprep.subr.mxu0 0.0
    %1805 = vmatpush1.msra.mxu0 0.0
    %1806 = vmatprep.subr.mxu0 0.0
    %1807 = vmatpush1.msra.mxu0 0.0
    %1808 = vmatprep.subr.mxu0 0.0
    %1809 = vmatpush1.msra.mxu0 0.0
    %1810 = vmatprep.subr.mxu0 0.0
    %1811 = vmatpush1.msra.mxu0 0.0
    %1812 = vmatprep.mubr.f32.mxu0 0.0
    %1813 = vmatmul.mubr.f32.gmra.mrb[0].mxu0 %v1743
    %v1814 = vpop.f32.mrb[0].mxu0
    %v1815 = vadd.f32 %v1729, %v1814
    %v1816 = vpop.f32.mrb[0].mxu0
    %1817 = vmatprep.mubr.f32.mxu0 0.0
    %1818 = vmatmul.mubr.f32.gmra.mrb[0].mxu0 %v1746
    %v1819 = vpop.f32.mrb[0].mxu0
    %v1820 = vadd.f32 %v1729, %v1819
    %v1821 = vpop.f32.mrb[0].mxu0
    %1822 = vdwg.mxu0
    %v1823 = vadd.f32 %v39, %v1815
    %v1824 = vadd.f32 %v40, %v1820
    %v1825 = vsel %vm54, %v1823, 0.0
    %1826 = vadd.xlane.f32.xlu0 %v1825
    %v1827 = vpop.xlane.xlu0 %1826
    %v1828 = vsel %vm54, %v1824, 0.0
    %1829 = vadd.xlane.f32.xlu0 %v1828
    %v1830 = vpop.xlane.xlu0 %1829
    %v1831 = vrcp.pop 32.0
    %v1832 = vmul.f32 %v1827, %v1831
    %v1833 = vmul.f32 %v1830, %v1831
    %v1834 = vsub.f32 %v1823, %v1832
    %v1835 = vsub.f32 %v1824, %v1833
    %v1836 = vmul.f32 %v1834, %v1834
    %v1837 = vmul.f32 %v1835, %v1835
    %v1838 = vsel %vm54, %v1836, 0.0
    %1839 = vadd.xlane.f32.xlu0 %v1838
    %v1840 = vpop.xlane.xlu0 %1839
    %v1841 = vsel %vm54, %v1837, 0.0
    %1842 = vadd.xlane.f32.xlu0 %v1841
    %v1843 = vpop.xlane.xlu0 %1842
    %v1844 = vmul.f32 %v1840, %v1831
    %v1845 = vmul.f32 %v1843, %v1831
    %v1846 = vadd.f32 %v1844, 1e-05
    %v1847 = vadd.f32 %v1845, 1e-05
    %v1848 = vrsqrt.pop %v1846
    %v1849 = vrsqrt.pop %v1847
    %v1850 = vmul.f32 %v1834, %v1848
    %v1851 = vmul.f32 %v1835, %v1849
    %1853 = vrot.lane.b32.xlu0 %v1729, 96
    %v1854 = vpop.permute.xlu0 %1853
    %v1856 = vmul.f32 %v1850, %v1854
    %v1857 = vmul.f32 %v1851, %v1854
    %1858 = vrot.lane.b32.xlu0 %v1729, 64
    %v1859 = vpop.permute.xlu0 %1858
    %v1861 = vadd.f32 %v1856, %v1859
    %v1862 = vadd.f32 %v1857, %v1859
    %v1863 = vlaneseq
    %v1864 = vshrl.u32 %v1863, 7
    %v1865 = vsub.s32 2, %v1864
    %v1866 = vrot.slane %v49, %v1865
    %v1868 = vsel %vm54, %v1861, 0
    %v1871 = vsel %vm54, %v1862, 0
    %1873 = vmatprep.subr.mxu0 0.0
    %1874 = vmatpush1.msra.mxu0 %v42
    %1875 = vmatprep.subr.mxu0 0.0
    %1876 = vmatpush1.msra.mxu0 %v44
    %1877 = vmatprep.subr.mxu0 0.0
    %1878 = vmatpush1.msra.mxu0 %v46
    %1879 = vmatprep.subr.mxu0 0.0
    %1880 = vmatpush1.msra.mxu0 %v48
    %1881 = vmatprep.subr.mxu0 0.0
    %1882 = vmatpush1.msra.mxu0 0.0
    %1883 = vmatprep.subr.mxu0 0.0
    %1884 = vmatpush1.msra.mxu0 0.0
    %1885 = vmatprep.subr.mxu0 0.0
    %1886 = vmatpush1.msra.mxu0 0.0
    %1887 = vmatprep.subr.mxu0 0.0
    %1888 = vmatpush1.msra.mxu0 0.0
    %1889 = vmatprep.subr.mxu0 0.0
    %1890 = vmatpush1.msra.mxu0 0.0
    %1891 = vmatprep.subr.mxu0 0.0
    %1892 = vmatpush1.msra.mxu0 0.0
    %1893 = vmatprep.subr.mxu0 0.0
    %1894 = vmatpush1.msra.mxu0 0.0
    %1895 = vmatprep.subr.mxu0 0.0
    %1896 = vmatpush1.msra.mxu0 0.0
    %1897 = vmatprep.subr.mxu0 0.0
    %1898 = vmatpush1.msra.mxu0 0.0
    %1899 = vmatprep.subr.mxu0 0.0
    %1900 = vmatpush1.msra.mxu0 0.0
    %1901 = vmatprep.subr.mxu0 0.0
    %1902 = vmatpush1.msra.mxu0 0.0
    %1903 = vmatprep.subr.mxu0 0.0
    %1904 = vmatpush1.msra.mxu0 0.0
    %1905 = vmatprep.subr.mxu0 0.0
    %1906 = vmatpush1.msra.mxu0 0.0
    %1907 = vmatprep.subr.mxu0 0.0
    %1908 = vmatpush1.msra.mxu0 0.0
    %1909 = vmatprep.subr.mxu0 0.0
    %1910 = vmatpush1.msra.mxu0 0.0
    %1911 = vmatprep.subr.mxu0 0.0
    %1912 = vmatpush1.msra.mxu0 0.0
    %1913 = vmatprep.subr.mxu0 0.0
    %1914 = vmatpush1.msra.mxu0 0.0
    %1915 = vmatprep.subr.mxu0 0.0
    %1916 = vmatpush1.msra.mxu0 0.0
    %1917 = vmatprep.subr.mxu0 0.0
    %1918 = vmatpush1.msra.mxu0 0.0
    %1919 = vmatprep.subr.mxu0 0.0
    %1920 = vmatpush1.msra.mxu0 0.0
    %1921 = vmatprep.subr.mxu0 0.0
    %1922 = vmatpush1.msra.mxu0 0.0
    %1923 = vmatprep.subr.mxu0 0.0
    %1924 = vmatpush1.msra.mxu0 0.0
    %1925 = vmatprep.subr.mxu0 0.0
    %1926 = vmatpush1.msra.mxu0 0.0
    %1927 = vmatprep.subr.mxu0 0.0
    %1928 = vmatpush1.msra.mxu0 0.0
    %1929 = vmatprep.subr.mxu0 0.0
    %1930 = vmatpush1.msra.mxu0 0.0
    %1931 = vmatprep.subr.mxu0 0.0
    %1932 = vmatpush1.msra.mxu0 0.0
    %1933 = vmatprep.subr.mxu0 0.0
    %1934 = vmatpush1.msra.mxu0 0.0
    %1935 = vmatprep.subr.mxu0 0.0
    %1936 = vmatpush1.msra.mxu0 0.0
    %1937 = vmatprep.mubr.f32.mxu0 0.0
    %1938 = vmatmul.mubr.f32.gmra.mrb[0].mxu0 %v1868
    %v1939 = vpop.f32.mrb[0].mxu0
    %v1940 = vadd.f32 %v1866, %v1939
    %v1941 = vpop.f32.mrb[0].mxu0
    %1942 = vmatprep.mubr.f32.mxu0 0.0
    %1943 = vmatmul.mubr.f32.gmra.mrb[0].mxu0 %v1871
    %v1944 = vpop.f32.mrb[0].mxu0
    %v1945 = vadd.f32 %v1866, %v1944
    %v1946 = vpop.f32.mrb[0].mxu0
    %1947 = vdwg.mxu0
    %v1948 = vmax.f32 %v1940, 0.0
    %v1949 = vmax.f32 %v1945, 0.0
    %v1950 = vld [vmem:[%s3] sm:$0xff]
    %v1951 = vld [vmem:[%s3 + $0x8] sm:$0xff]
    %v1952 = vld [vmem:[%s3 + $0x10] sm:$0xff]
    %v1953 = vld [vmem:[%s3 + $0x18] sm:$0xff]
    %v1954 = vld [vmem:[%s3 + $0x20] sm:$0xff]
    %v1955 = vld [vmem:[%s3 + $0x28] sm:$0xff]
    %v1956 = vld [vmem:[%s3 + $0x30] sm:$0xff]
    %v1957 = vld [vmem:[%s3 + $0x38] sm:$0xff]
    %1959 = vrot.lane.b32.xlu0 %v1866, 64
    %v1960 = vpop.permute.xlu0 %1959
    %vm1962 = vcmask 523264
    %v1964 = vsel %vm1962, %v1948, 0
    %v1967 = vsel %vm1962, %v1949, 0
    %1969 = vmatprep.subr.mxu0 0.0
    %1970 = vmatpush1.msra.mxu0 %v1950
    %1971 = vmatprep.subr.mxu0 0.0
    %1972 = vmatpush1.msra.mxu0 %v1951
    %1973 = vmatprep.subr.mxu0 0.0
    %1974 = vmatpush1.msra.mxu0 %v1952
    %1975 = vmatprep.subr.mxu0 0.0
    %1976 = vmatpush1.msra.mxu0 %v1953
    %1977 = vmatprep.subr.mxu0 0.0
    %1978 = vmatpush1.msra.mxu0 %v1954
    %1979 = vmatprep.subr.mxu0 0.0
    %1980 = vmatpush1.msra.mxu0 %v1955
    %1981 = vmatprep.subr.mxu0 0.0
    %1982 = vmatpush1.msra.mxu0 %v1956
    %1983 = vmatprep.subr.mxu0 0.0
    %1984 = vmatpush1.msra.mxu0 %v1957
    %1985 = vmatprep.subr.mxu0 0.0
    %1986 = vmatpush1.msra.mxu0 0.0
    %1987 = vmatprep.subr.mxu0 0.0
    %1988 = vmatpush1.msra.mxu0 0.0
    %1989 = vmatprep.subr.mxu0 0.0
    %1990 = vmatpush1.msra.mxu0 0.0
    %1991 = vmatprep.subr.mxu0 0.0
    %1992 = vmatpush1.msra.mxu0 0.0
    %1993 = vmatprep.subr.mxu0 0.0
    %1994 = vmatpush1.msra.mxu0 0.0
    %1995 = vmatprep.subr.mxu0 0.0
    %1996 = vmatpush1.msra.mxu0 0.0
    %1997 = vmatprep.subr.mxu0 0.0
    %1998 = vmatpush1.msra.mxu0 0.0
    %1999 = vmatprep.subr.mxu0 0.0
    %2000 = vmatpush1.msra.mxu0 0.0
    %2001 = vmatprep.subr.mxu0 0.0
    %2002 = vmatpush1.msra.mxu0 0.0
    %2003 = vmatprep.subr.mxu0 0.0
    %2004 = vmatpush1.msra.mxu0 0.0
    %2005 = vmatprep.subr.mxu0 0.0
    %2006 = vmatpush1.msra.mxu0 0.0
    %2007 = vmatprep.subr.mxu0 0.0
    %2008 = vmatpush1.msra.mxu0 0.0
    %2009 = vmatprep.subr.mxu0 0.0
    %2010 = vmatpush1.msra.mxu0 0.0
    %2011 = vmatprep.subr.mxu0 0.0
    %2012 = vmatpush1.msra.mxu0 0.0
    %2013 = vmatprep.subr.mxu0 0.0
    %2014 = vmatpush1.msra.mxu0 0.0
    %2015 = vmatprep.subr.mxu0 0.0
    %2016 = vmatpush1.msra.mxu0 0.0
    %2017 = vmatprep.subr.mxu0 0.0
    %2018 = vmatpush1.msra.mxu0 0.0
    %2019 = vmatprep.subr.mxu0 0.0
    %2020 = vmatpush1.msra.mxu0 0.0
    %2021 = vmatprep.subr.mxu0 0.0
    %2022 = vmatpush1.msra.mxu0 0.0
    %2023 = vmatprep.subr.mxu0 0.0
    %2024 = vmatpush1.msra.mxu0 0.0
    %2025 = vmatprep.subr.mxu0 0.0
    %2026 = vmatpush1.msra.mxu0 0.0
    %2027 = vmatprep.subr.mxu0 0.0
    %2028 = vmatpush1.msra.mxu0 0.0
    %2029 = vmatprep.subr.mxu0 0.0
    %2030 = vmatpush1.msra.mxu0 0.0
    %2031 = vmatprep.subr.mxu0 0.0
    %2032 = vmatpush1.msra.mxu0 0.0
    %2033 = vmatprep.mubr.f32.mxu0 0.0
    %2034 = vmatmul.mubr.f32.gmra.mrb[0].mxu0 %v1964
    %v2035 = vpop.f32.mrb[0].mxu0
    %v2036 = vadd.f32 %v1960, %v2035
    %v2037 = vpop.f32.mrb[0].mxu0
    %2038 = vmatprep.mubr.f32.mxu0 0.0
    %2039 = vmatmul.mubr.f32.gmra.mrb[0].mxu0 %v1967
    %v2040 = vpop.f32.mrb[0].mxu0
    %v2041 = vadd.f32 %v1960, %v2040
    %v2042 = vpop.f32.mrb[0].mxu0
    %2043 = vdwg.mxu0
    %v2044 = vadd.f32 %v1861, %v2036
    %v2045 = vadd.f32 %v1862, %v2041
    %v2046 = vsel %vm54, %v2044, 0.0
    %2047 = vadd.xlane.f32.xlu0 %v2046
    %v2048 = vpop.xlane.xlu0 %2047
    %v2049 = vsel %vm54, %v2045, 0.0
    %2050 = vadd.xlane.f32.xlu0 %v2049
    %v2051 = vpop.xlane.xlu0 %2050
    %v2052 = vmul.f32 %v2048, %v1831
    %v2053 = vmul.f32 %v2051, %v1831
    %v2054 = vsub.f32 %v2044, %v2052
    %v2055 = vsub.f32 %v2045, %v2053
    %v2056 = vmul.f32 %v2054, %v2054
    %v2057 = vmul.f32 %v2055, %v2055
    %v2058 = vsel %vm54, %v2056, 0.0
    %2059 = vadd.xlane.f32.xlu0 %v2058
    %v2060 = vpop.xlane.xlu0 %2059
    %v2061 = vsel %vm54, %v2057, 0.0
    %2062 = vadd.xlane.f32.xlu0 %v2061
    %v2063 = vpop.xlane.xlu0 %2062
    %v2064 = vmul.f32 %v2060, %v1831
    %v2065 = vmul.f32 %v2063, %v1831
    %v2066 = vadd.f32 %v2064, 1e-05
    %v2067 = vadd.f32 %v2065, 1e-05
    %v2068 = vrsqrt.pop %v2066
    %v2069 = vrsqrt.pop %v2067
    %v2070 = vmul.f32 %v2054, %v2068
    %v2071 = vmul.f32 %v2055, %v2069
    %v2072 = vlaneseq
    %v2073 = vshrl.u32 %v2072, 7
    %v2074 = vsub.s32 3, %v2073
    %v2075 = vrot.slane %v49, %v2074
    %v2076 = vmul.f32 %v2070, %v2075
    %v2077 = vmul.f32 %v2071, %v2075
    %2079 = vrot.lane.b32.xlu0 %v2075, 96
    %v2080 = vpop.permute.xlu0 %2079
    %v2082 = vadd.f32 %v2076, %v2080
    %v2083 = vadd.f32 %v2077, %v2080
    %2084 = vst.msk [vmem:[#allocation6] sm:$0xff] %vm54, %v2082
    %2085 = vst.msk [vmem:[#allocation6 + $0x8] sm:$0xff] %vm54, %v2083
    // Predicated region
    $region26: #{tpu_custom_call.1} parent=1 // pred_check
      _
    $region27: #{tpu_custom_call.1} parent=1 // pred_check_branch
      %2087 = sbr.rel (0) target = $region29
    $region28: #{tpu_custom_call.1} parent=1 // pred_region
      %s2089 = ssub.s32 256, 256
      %2090 = vsyncadd [#allocation5], %s2089
      %s2091 = sshll.u32 [#allocation6], 4
      %s2092 = int_to_ptr.vmem [resolvable:$true] %s2091
      %2097 = dma.vmem_to_hbm [thread:$0]  %s2092, 256, %s5, [#allocation5], 128, 128, 8
    $region29: #{tpu_custom_call.1} parent=1 // pred_fallthru
      _
    // Predicated region
    $region30: #{tpu_custom_call.1} parent=1 // pred_check
      _
    $region31: #{tpu_custom_call.1} parent=1 // pred_check_branch
      %2099 = sbr.rel (0) target = $region33
    $region32: #{tpu_custom_call.1} parent=1 // pred_region
      %2100 = dma.done [#allocation5], 256
    $region33: #{tpu_custom_call.1} parent=1 // pred_fallthru
      _
    %2101 = vsyncpa [#allocation4], 1
    %2102 = vsyncpa [#allocation5], 1

</llo_original>
